<compile_context>
chip_gen: v7x
topology: tpu7x:2x2x1
jax: 0.10.0
libtpu: 0.0.40
codegen_flags: <defaults>
</compile_context>

<pallas_src>
import jax
import jax.numpy as jnp
from jax.experimental import pallas as pl
from jax.experimental.pallas import tpu as pltpu


def _physical_vmem_bytes(default=64 * 2**20):
    try:
        return int(getattr(pltpu.get_tpu_info(), "vmem_capacity_bytes", default))
    except Exception:
        return default


def _const_block_spec(shape, single_buffer=False):
    """BlockSpec for a grid-invariant operand (constant index_map, resident)."""
    index_map = lambda b, s, _shape=shape: (0,) * len(_shape)
    if single_buffer:
        try:
            # Constant index_map -> only one fetch ever happens, so one buffer
            # is enough; saves a full weight-sized VMEM allocation.
            return pl.BlockSpec(shape, index_map, pipeline_mode=pl.Buffered(1))
        except Exception:
            pass
    return pl.BlockSpec(shape, index_map)


def _pick_row_tile(B, H2, W2, C, itemsize, stream_budget_bytes, max_unroll=32):
    """Pick how many output rows (h2) one grid step handles."""

    def per_step_bytes(t):
        x_blk = C * t * 4 * W2 * itemsize          # (C, t, 2W) input tile
        o_blk = 2 * C * t * W2 * itemsize          # (2C, t*W2) output tile
        xg = 4 * C * t * W2 * itemsize             # merged-feature VMEM scratch
        return 2 * x_blk + 2 * o_blk + xg          # streamed tiles double-buffered

    cands = []
    t = 8
    while t < H2 and t <= max_unroll:
        if (t * W2) % 128 == 0:                    # keep the output block lane-dense
            cands.append(t)
        t += 8
    if H2 <= max_unroll or not cands:
        cands.append(H2)                           # full extent is always a legal block
    fitting = [t for t in cands if per_step_bytes(t) <= stream_budget_bytes]
    if not fitting:
        fitting = [min(cands)]
    # Largest tile that still leaves >= 4 grid steps (megacore sharding and
    # DMA/compute pipelining on v7x); otherwise just the largest fitting tile.
    best = None
    for t in sorted(fitting):
        if B * pl.cdiv(H2, t) >= 4:
            best = t
    return best if best is not None else max(fitting)


def edf_forward(x, weight, bias, *, compute_dtype=None):
    """Equivalent of EDF.forward.

    x:      (B, C, H, W), H and W even
    weight: (2C, 4C)  nn.Linear weight (column order (rh, rw, c))
    bias:   (2C,)     nn.Linear bias
    compute_dtype: optional streaming dtype (e.g. jnp.bfloat16) for
        bandwidth-starved parts; accumulation stays f32.  Default (None) keeps
        the input dtype, i.e. the PyTorch module's semantics.
    returns (B, 2C, H//2, W//2)
    """
    B, C, H, W = x.shape
    assert H % 2 == 0 and W % 2 == 0, "EDF requires even H and W"
    H2, W2 = H // 2, W // 2
    N, K = 2 * C, 4 * C
    assert weight.shape == (N, K) and bias.shape == (N,)

    if compute_dtype is not None:
        x = x.astype(compute_dtype)
        weight = weight.astype(compute_dtype)
    dtype = x.dtype
    itemsize = jnp.dtype(dtype).itemsize

    # Free reshape (same linear memory order as NCHW): lane index m = rh*W + w,
    # i.e. each "double row" holds the even input row followed by the odd one.
    xr = x.reshape(B, C, H2, 2 * W)

    # Constant 0/1 de-interleave matrix: sel[w, rw*W2 + w2] = (w == 2*w2 + rw).
    w_idx = jnp.arange(W, dtype=jnp.int32)[:, None]
    j_idx = jnp.arange(2 * W2, dtype=jnp.int32)[None, :]
    sel = (w_idx == 2 * (j_idx % W2) + (j_idx // W2)).astype(dtype)

    b2 = bias.reshape(N, 1).astype(jnp.float32)    # f32 bias, added before the cast

    # --- VMEM accounting / tiling -------------------------------------------
    phys_vmem = _physical_vmem_bytes()
    resident = N * K * itemsize                            # weight (single buffer)
    resident += 2 * (N * 4 + W * 2 * W2 * itemsize)        # bias (f32) + sel (2 buffers)
    stream_budget = max(8 * 2**20,
                        (min(phys_vmem, 64 * 2**20) * 3) // 4 - resident)
    tH2 = _pick_row_tile(B, H2, W2, C, itemsize, stream_budget)
    tS = tH2 * W2
    grid = (B, pl.cdiv(H2, tH2))

    per_step = (2 * C * tH2 * 2 * W + 2 * N * tS + K * tS) * itemsize
    vmem_limit = int(min(max(resident + per_step + (4 << 20), 16 << 20),
                         max(phys_vmem - (8 << 20), 32 << 20)))

    # --- kernel ---------------------------------------------------------------
    def kernel(x_ref, w_ref, b_ref, sel_ref, o_ref, xg_ref):
        # x_ref:   (C, tH2, 2W)   sel_ref: (W, 2*W2)
        # w_ref:   (2C, 4C)       o_ref:   (2C, tH2*W2)
        # b_ref:   (2C, 1) f32    xg_ref:  (4C, tH2*W2) VMEM scratch
        sel_m = sel_ref[...]
        # On-chip 2x2 patch merge (static unroll -> all static slices).
        for r in range(tH2):
            row = x_ref[:, r, :]                   # (C, 2W); lanes = [rh=0 row | rh=1 row]
            h0 = row[:, :W]                        # even input row  (rh = 0)
            h1 = row[:, W:]                        # odd input row   (rh = 1)
            # Exact 0/1 matmul de-interleaves even/odd columns (uses MXU slack).
            q0 = jnp.dot(h0, sel_m, preferred_element_type=jnp.float32).astype(xg_ref.dtype)
            q1 = jnp.dot(h1, sel_m, preferred_element_type=jnp.float32).astype(xg_ref.dtype)
            cols = slice(r * W2, (r + 1) * W2)
            xg_ref[0 * C:1 * C, cols] = q0[:, :W2]   # (rh=0, rw=0)
            xg_ref[1 * C:2 * C, cols] = q0[:, W2:]   # (rh=0, rw=1)
            xg_ref[2 * C:3 * C, cols] = q1[:, :W2]   # (rh=1, rw=0)
            xg_ref[3 * C:4 * C, cols] = q1[:, W2:]   # (rh=1, rw=1)
        # Channel reduction: one big MXU matmul per grid step, lane-dense store.
        acc = jnp.dot(w_ref[...], xg_ref[...], preferred_element_type=jnp.float32)
        o_ref[...] = (acc + b_ref[...]).astype(o_ref.dtype)

    flops = 2 * B * H2 * W2 * K * N + 8 * B * H2 * W2 * C * W
    cost = pl.CostEstimate(
        flops=int(flops),
        transcendentals=0,
        bytes_accessed=int(itemsize * (B * C * H * W + N * K + W * 2 * W2
                                       + B * N * H2 * W2) + 4 * N),
    )

    out = pl.pallas_call(
        kernel,
        out_shape=jax.ShapeDtypeStruct((B, N, H2 * W2), dtype),
        grid_spec=pltpu.PrefetchScalarGridSpec(
            num_scalar_prefetch=0,
            grid=grid,
            in_specs=[
                pl.BlockSpec((None, C, tH2, 2 * W), lambda b, s: (b, 0, s, 0)),
                _const_block_spec((N, K), single_buffer=True),   # weight (resident, 1 buf)
                _const_block_spec((N, 1)),                        # bias (f32)
                _const_block_spec((W, 2 * W2)),                   # de-interleave matrix
            ],
            out_specs=pl.BlockSpec((None, N, tS), lambda b, s: (b, 0, s)),
            scratch_shapes=[pltpu.VMEM((K, tS), dtype)],
        ),
        compiler_params=pltpu.CompilerParams(
            dimension_semantics=("parallel", "parallel"),
            vmem_limit_bytes=vmem_limit,
        ),
        cost_estimate=cost,
    )(xr, weight, b2, sel)

    # (B, 2C, H2*W2) -> (B, 2C, H2, W2): free reshape, no transpose needed.
    return out.reshape(B, N, H2, W2)


def _edf_reference(x, weight, bias):
    """Pure-JAX reference mirroring the PyTorch forward, for verification."""
    B, C, H, W = x.shape
    H2, W2 = H // 2, W // 2
    xr = x.reshape(B, C, H2, 2, W2, 2)
    xr = jnp.transpose(xr, (0, 2, 4, 3, 5, 1)).reshape(B, H2, W2, 4 * C)
    y = xr @ weight.T + bias
    return jnp.transpose(y, (0, 3, 1, 2))


if __name__ == "__main__":
    # Small shapes consistent with the module: B=2, C=4, H=W=16.
    B, C, H, W = 2, 4, 16, 16
    key = jax.random.PRNGKey(0)
    kx, kw, kb = jax.random.split(key, 3)

    x = jax.random.normal(kx, (B, C, H, W), dtype=jnp.float32)
    # Deterministic parameters (shapes from nn.Linear(4*C, 2*C)).
    weight = jax.random.normal(kw, (2 * C, 4 * C), dtype=jnp.float32) * 0.1
    bias = jax.random.normal(kb, (2 * C,), dtype=jnp.float32) * 0.1

    y = jax.block_until_ready(edf_forward(x, weight, bias))
    y_ref = _edf_reference(x, weight, bias)

    assert y.shape == (B, 2 * C, H // 2, W // 2), y.shape
    assert jnp.allclose(y, y_ref, atol=1e-5, rtol=1e-5), "mismatch vs reference"

    print("KERNEL_OK")
</pallas_src>

<mosaic_0001>
module attributes {stable_mosaic.version = 11 : i64} {
  func.func @kernel(%arg0: i32, %arg1: i32, %arg2: memref<1x4x8x32xf32, #tpu.memory_space<vmem>>, %arg3: memref<8x16xf32, #tpu.memory_space<vmem>>, %arg4: memref<8x1xf32, #tpu.memory_space<vmem>>, %arg5: memref<16x16xf32, #tpu.memory_space<vmem>>, %arg6: memref<1x8x64xf32, #tpu.memory_space<vmem>>, %arg7: memref<16x64xf32, #tpu.memory_space<vmem>>) attributes {dimension_semantics = [#tpu.dimension_semantics<parallel>, #tpu.dimension_semantics<parallel>], iteration_bounds = array<i64: 2, 1>, scalar_prefetch = 0 : i64, scratch_operands = 1 : i64, tpu.core_type = #tpu.core_type<tc>, window_params = [{transform_indices = @transform_0, window_bounds = array<i64: 1, 4, 8, 32>}, {pipeline_mode = #tpu.pipeline_mode<synchronous>, transform_indices = @transform_1, window_bounds = array<i64: 8, 16>}, {pipeline_mode = #tpu.pipeline_mode<synchronous>, transform_indices = @transform_2, window_bounds = array<i64: 8, 1>}, {pipeline_mode = #tpu.pipeline_mode<synchronous>, transform_indices = @transform_3, window_bounds = array<i64: 16, 16>}, {transform_indices = @transform_4, window_bounds = array<i64: 1, 8, 64>}]} {
    %c0 = arith.constant 0 : index
    %c0_0 = arith.constant 0 : index
    %0 = vector.load %arg5[%c0, %c0_0] : memref<16x16xf32, #tpu.memory_space<vmem>>, vector<16x16xf32>
    %c0_1 = arith.constant 0 : index
    %c0_2 = arith.constant 0 : index
    %c0_3 = arith.constant 0 : index
    %c0_4 = arith.constant 0 : index
    %1 = vector.load %arg2[%c0_1, %c0_2, %c0_3, %c0_4] : memref<1x4x8x32xf32, #tpu.memory_space<vmem>>, vector<1x4x1x32xf32>
    %2 = vector.shape_cast %1 : vector<1x4x1x32xf32> to vector<4x32xf32>
    %3 = vector.extract_strided_slice %2 {offsets = [0, 0], sizes = [4, 16], strides = [1, 1]} : vector<4x32xf32> to vector<4x16xf32>
    %4 = vector.extract_strided_slice %2 {offsets = [0, 16], sizes = [4, 16], strides = [1, 1]} : vector<4x32xf32> to vector<4x16xf32>
    %cst = arith.constant dense<0.000000e+00> : vector<4x16xf32>
    %5 = tpu.matmul %3, %0, %cst {dimension_numbers = #tpu.dot_dimension_numbers<[1], [0], [0], [1], [0, 0, 1, 1], [], []>} : vector<4x16xf32>, vector<16x16xf32>, vector<4x16xf32> -> vector<4x16xf32>
    %cst_5 = arith.constant dense<0.000000e+00> : vector<4x16xf32>
    %6 = tpu.matmul %4, %0, %cst_5 {dimension_numbers = #tpu.dot_dimension_numbers<[1], [0], [0], [1], [0, 0, 1, 1], [], []>} : vector<4x16xf32>, vector<16x16xf32>, vector<4x16xf32> -> vector<4x16xf32>
    %7 = vector.extract_strided_slice %5 {offsets = [0, 0], sizes = [4, 8], strides = [1, 1]} : vector<4x16xf32> to vector<4x8xf32>
    %c0_6 = arith.constant 0 : index
    %c0_7 = arith.constant 0 : index
    %8 = vector.load %arg7[%c0_6, %c0_7] : memref<16x64xf32, #tpu.memory_space<vmem>>, vector<4x8xf32>
    tpu.vector_store %arg7[%c0_6, %c0_7], %7 {strides = array<i32>} : memref<16x64xf32, #tpu.memory_space<vmem>>, vector<4x8xf32>,
    %9 = vector.extract_strided_slice %5 {offsets = [0, 8], sizes = [4, 8], strides = [1, 1]} : vector<4x16xf32> to vector<4x8xf32>
    %c4 = arith.constant 4 : index
    %c0_8 = arith.constant 0 : index
    %10 = vector.load %arg7[%c4, %c0_8] : memref<16x64xf32, #tpu.memory_space<vmem>>, vector<4x8xf32>
    tpu.vector_store %arg7[%c4, %c0_8], %9 {strides = array<i32>} : memref<16x64xf32, #tpu.memory_space<vmem>>, vector<4x8xf32>,
    %11 = vector.extract_strided_slice %6 {offsets = [0, 0], sizes = [4, 8], strides = [1, 1]} : vector<4x16xf32> to vector<4x8xf32>
    %c8 = arith.constant 8 : index
    %c0_9 = arith.constant 0 : index
    %12 = vector.load %arg7[%c8, %c0_9] : memref<16x64xf32, #tpu.memory_space<vmem>>, vector<4x8xf32>
    tpu.vector_store %arg7[%c8, %c0_9], %11 {strides = array<i32>} : memref<16x64xf32, #tpu.memory_space<vmem>>, vector<4x8xf32>,
    %13 = vector.extract_strided_slice %6 {offsets = [0, 8], sizes = [4, 8], strides = [1, 1]} : vector<4x16xf32> to vector<4x8xf32>
    %c12 = arith.constant 12 : index
    %c0_10 = arith.constant 0 : index
    %14 = vector.load %arg7[%c12, %c0_10] : memref<16x64xf32, #tpu.memory_space<vmem>>, vector<4x8xf32>
    tpu.vector_store %arg7[%c12, %c0_10], %13 {strides = array<i32>} : memref<16x64xf32, #tpu.memory_space<vmem>>, vector<4x8xf32>,
    %c0_11 = arith.constant 0 : index
    %c0_12 = arith.constant 0 : index
    %c1 = arith.constant 1 : index
    %c0_13 = arith.constant 0 : index
    %15 = vector.load %arg2[%c0_11, %c0_12, %c1, %c0_13] : memref<1x4x8x32xf32, #tpu.memory_space<vmem>>, vector<1x4x1x32xf32>
    %16 = vector.shape_cast %15 : vector<1x4x1x32xf32> to vector<4x32xf32>
    %17 = vector.extract_strided_slice %16 {offsets = [0, 0], sizes = [4, 16], strides = [1, 1]} : vector<4x32xf32> to vector<4x16xf32>
    %18 = vector.extract_strided_slice %16 {offsets = [0, 16], sizes = [4, 16], strides = [1, 1]} : vector<4x32xf32> to vector<4x16xf32>
    %cst_14 = arith.constant dense<0.000000e+00> : vector<4x16xf32>
    %19 = tpu.matmul %17, %0, %cst_14 {dimension_numbers = #tpu.dot_dimension_numbers<[1], [0], [0], [1], [0, 0, 1, 1], [], []>} : vector<4x16xf32>, vector<16x16xf32>, vector<4x16xf32> -> vector<4x16xf32>
    %cst_15 = arith.constant dense<0.000000e+00> : vector<4x16xf32>
    %20 = tpu.matmul %18, %0, %cst_15 {dimension_numbers = #tpu.dot_dimension_numbers<[1], [0], [0], [1], [0, 0, 1, 1], [], []>} : vector<4x16xf32>, vector<16x16xf32>, vector<4x16xf32> -> vector<4x16xf32>
    %21 = vector.extract_strided_slice %19 {offsets = [0, 0], sizes = [4, 8], strides = [1, 1]} : vector<4x16xf32> to vector<4x8xf32>
    %c0_16 = arith.constant 0 : index
    %c8_17 = arith.constant 8 : index
    %22 = vector.load %arg7[%c0_16, %c8_17] : memref<16x64xf32, #tpu.memory_space<vmem>>, vector<4x8xf32>
    tpu.vector_store %arg7[%c0_16, %c8_17], %21 {strides = array<i32>} : memref<16x64xf32, #tpu.memory_space<vmem>>, vector<4x8xf32>,
    %23 = vector.extract_strided_slice %19 {offsets = [0, 8], sizes = [4, 8], strides = [1, 1]} : vector<4x16xf32> to vector<4x8xf32>
    %c4_18 = arith.constant 4 : index
    %c8_19 = arith.constant 8 : index
    %24 = vector.load %arg7[%c4_18, %c8_19] : memref<16x64xf32, #tpu.memory_space<vmem>>, vector<4x8xf32>
    tpu.vector_store %arg7[%c4_18, %c8_19], %23 {strides = array<i32>} : memref<16x64xf32, #tpu.memory_space<vmem>>, vector<4x8xf32>,
    %25 = vector.extract_strided_slice %20 {offsets = [0, 0], sizes = [4, 8], strides = [1, 1]} : vector<4x16xf32> to vector<4x8xf32>
    %c8_20 = arith.constant 8 : index
    %c8_21 = arith.constant 8 : index
    %26 = vector.load %arg7[%c8_20, %c8_21] : memref<16x64xf32, #tpu.memory_space<vmem>>, vector<4x8xf32>
    tpu.vector_store %arg7[%c8_20, %c8_21], %25 {strides = array<i32>} : memref<16x64xf32, #tpu.memory_space<vmem>>, vector<4x8xf32>,
    %27 = vector.extract_strided_slice %20 {offsets = [0, 8], sizes = [4, 8], strides = [1, 1]} : vector<4x16xf32> to vector<4x8xf32>
    %c12_22 = arith.constant 12 : index
    %c8_23 = arith.constant 8 : index
    %28 = vector.load %arg7[%c12_22, %c8_23] : memref<16x64xf32, #tpu.memory_space<vmem>>, vector<4x8xf32>
    tpu.vector_store %arg7[%c12_22, %c8_23], %27 {strides = array<i32>} : memref<16x64xf32, #tpu.memory_space<vmem>>, vector<4x8xf32>,
    %c0_24 = arith.constant 0 : index
    %c0_25 = arith.constant 0 : index
    %c2 = arith.constant 2 : index
    %c0_26 = arith.constant 0 : index
    %29 = vector.load %arg2[%c0_24, %c0_25, %c2, %c0_26] : memref<1x4x8x32xf32, #tpu.memory_space<vmem>>, vector<1x4x1x32xf32>
    %30 = vector.shape_cast %29 : vector<1x4x1x32xf32> to vector<4x32xf32>
    %31 = vector.extract_strided_slice %30 {offsets = [0, 0], sizes = [4, 16], strides = [1, 1]} : vector<4x32xf32> to vector<4x16xf32>
    %32 = vector.extract_strided_slice %30 {offsets = [0, 16], sizes = [4, 16], strides = [1, 1]} : vector<4x32xf32> to vector<4x16xf32>
    %cst_27 = arith.constant dense<0.000000e+00> : vector<4x16xf32>
    %33 = tpu.matmul %31, %0, %cst_27 {dimension_numbers = #tpu.dot_dimension_numbers<[1], [0], [0], [1], [0, 0, 1, 1], [], []>} : vector<4x16xf32>, vector<16x16xf32>, vector<4x16xf32> -> vector<4x16xf32>
    %cst_28 = arith.constant dense<0.000000e+00> : vector<4x16xf32>
    %34 = tpu.matmul %32, %0, %cst_28 {dimension_numbers = #tpu.dot_dimension_numbers<[1], [0], [0], [1], [0, 0, 1, 1], [], []>} : vector<4x16xf32>, vector<16x16xf32>, vector<4x16xf32> -> vector<4x16xf32>
    %35 = vector.extract_strided_slice %33 {offsets = [0, 0], sizes = [4, 8], strides = [1, 1]} : vector<4x16xf32> to vector<4x8xf32>
    %c0_29 = arith.constant 0 : index
    %c16 = arith.constant 16 : index
    %36 = vector.load %arg7[%c0_29, %c16] : memref<16x64xf32, #tpu.memory_space<vmem>>, vector<4x8xf32>
    tpu.vector_store %arg7[%c0_29, %c16], %35 {strides = array<i32>} : memref<16x64xf32, #tpu.memory_space<vmem>>, vector<4x8xf32>,
    %37 = vector.extract_strided_slice %33 {offsets = [0, 8], sizes = [4, 8], strides = [1, 1]} : vector<4x16xf32> to vector<4x8xf32>
    %c4_30 = arith.constant 4 : index
    %c16_31 = arith.constant 16 : index
    %38 = vector.load %arg7[%c4_30, %c16_31] : memref<16x64xf32, #tpu.memory_space<vmem>>, vector<4x8xf32>
    tpu.vector_store %arg7[%c4_30, %c16_31], %37 {strides = array<i32>} : memref<16x64xf32, #tpu.memory_space<vmem>>, vector<4x8xf32>,
    %39 = vector.extract_strided_slice %34 {offsets = [0, 0], sizes = [4, 8], strides = [1, 1]} : vector<4x16xf32> to vector<4x8xf32>
    %c8_32 = arith.constant 8 : index
    %c16_33 = arith.constant 16 : index
    %40 = vector.load %arg7[%c8_32, %c16_33] : memref<16x64xf32, #tpu.memory_space<vmem>>, vector<4x8xf32>
    tpu.vector_store %arg7[%c8_32, %c16_33], %39 {strides = array<i32>} : memref<16x64xf32, #tpu.memory_space<vmem>>, vector<4x8xf32>,
    %41 = vector.extract_strided_slice %34 {offsets = [0, 8], sizes = [4, 8], strides = [1, 1]} : vector<4x16xf32> to vector<4x8xf32>
    %c12_34 = arith.constant 12 : index
    %c16_35 = arith.constant 16 : index
    %42 = vector.load %arg7[%c12_34, %c16_35] : memref<16x64xf32, #tpu.memory_space<vmem>>, vector<4x8xf32>
    tpu.vector_store %arg7[%c12_34, %c16_35], %41 {strides = array<i32>} : memref<16x64xf32, #tpu.memory_space<vmem>>, vector<4x8xf32>,
    %c0_36 = arith.constant 0 : index
    %c0_37 = arith.constant 0 : index
    %c3 = arith.constant 3 : index
    %c0_38 = arith.constant 0 : index
    %43 = vector.load %arg2[%c0_36, %c0_37, %c3, %c0_38] : memref<1x4x8x32xf32, #tpu.memory_space<vmem>>, vector<1x4x1x32xf32>
    %44 = vector.shape_cast %43 : vector<1x4x1x32xf32> to vector<4x32xf32>
    %45 = vector.extract_strided_slice %44 {offsets = [0, 0], sizes = [4, 16], strides = [1, 1]} : vector<4x32xf32> to vector<4x16xf32>
    %46 = vector.extract_strided_slice %44 {offsets = [0, 16], sizes = [4, 16], strides = [1, 1]} : vector<4x32xf32> to vector<4x16xf32>
    %cst_39 = arith.constant dense<0.000000e+00> : vector<4x16xf32>
    %47 = tpu.matmul %45, %0, %cst_39 {dimension_numbers = #tpu.dot_dimension_numbers<[1], [0], [0], [1], [0, 0, 1, 1], [], []>} : vector<4x16xf32>, vector<16x16xf32>, vector<4x16xf32> -> vector<4x16xf32>
    %cst_40 = arith.constant dense<0.000000e+00> : vector<4x16xf32>
    %48 = tpu.matmul %46, %0, %cst_40 {dimension_numbers = #tpu.dot_dimension_numbers<[1], [0], [0], [1], [0, 0, 1, 1], [], []>} : vector<4x16xf32>, vector<16x16xf32>, vector<4x16xf32> -> vector<4x16xf32>
    %49 = vector.extract_strided_slice %47 {offsets = [0, 0], sizes = [4, 8], strides = [1, 1]} : vector<4x16xf32> to vector<4x8xf32>
    %c0_41 = arith.constant 0 : index
    %c24 = arith.constant 24 : index
    %50 = vector.load %arg7[%c0_41, %c24] : memref<16x64xf32, #tpu.memory_space<vmem>>, vector<4x8xf32>
    tpu.vector_store %arg7[%c0_41, %c24], %49 {strides = array<i32>} : memref<16x64xf32, #tpu.memory_space<vmem>>, vector<4x8xf32>,
    %51 = vector.extract_strided_slice %47 {offsets = [0, 8], sizes = [4, 8], strides = [1, 1]} : vector<4x16xf32> to vector<4x8xf32>
    %c4_42 = arith.constant 4 : index
    %c24_43 = arith.constant 24 : index
    %52 = vector.load %arg7[%c4_42, %c24_43] : memref<16x64xf32, #tpu.memory_space<vmem>>, vector<4x8xf32>
    tpu.vector_store %arg7[%c4_42, %c24_43], %51 {strides = array<i32>} : memref<16x64xf32, #tpu.memory_space<vmem>>, vector<4x8xf32>,
    %53 = vector.extract_strided_slice %48 {offsets = [0, 0], sizes = [4, 8], strides = [1, 1]} : vector<4x16xf32> to vector<4x8xf32>
    %c8_44 = arith.constant 8 : index
    %c24_45 = arith.constant 24 : index
    %54 = vector.load %arg7[%c8_44, %c24_45] : memref<16x64xf32, #tpu.memory_space<vmem>>, vector<4x8xf32>
    tpu.vector_store %arg7[%c8_44, %c24_45], %53 {strides = array<i32>} : memref<16x64xf32, #tpu.memory_space<vmem>>, vector<4x8xf32>,
    %55 = vector.extract_strided_slice %48 {offsets = [0, 8], sizes = [4, 8], strides = [1, 1]} : vector<4x16xf32> to vector<4x8xf32>
    %c12_46 = arith.constant 12 : index
    %c24_47 = arith.constant 24 : index
    %56 = vector.load %arg7[%c12_46, %c24_47] : memref<16x64xf32, #tpu.memory_space<vmem>>, vector<4x8xf32>
    tpu.vector_store %arg7[%c12_46, %c24_47], %55 {strides = array<i32>} : memref<16x64xf32, #tpu.memory_space<vmem>>, vector<4x8xf32>,
    %c0_48 = arith.constant 0 : index
    %c0_49 = arith.constant 0 : index
    %c4_50 = arith.constant 4 : index
    %c0_51 = arith.constant 0 : index
    %57 = vector.load %arg2[%c0_48, %c0_49, %c4_50, %c0_51] : memref<1x4x8x32xf32, #tpu.memory_space<vmem>>, vector<1x4x1x32xf32>
    %58 = vector.shape_cast %57 : vector<1x4x1x32xf32> to vector<4x32xf32>
    %59 = vector.extract_strided_slice %58 {offsets = [0, 0], sizes = [4, 16], strides = [1, 1]} : vector<4x32xf32> to vector<4x16xf32>
    %60 = vector.extract_strided_slice %58 {offsets = [0, 16], sizes = [4, 16], strides = [1, 1]} : vector<4x32xf32> to vector<4x16xf32>
    %cst_52 = arith.constant dense<0.000000e+00> : vector<4x16xf32>
    %61 = tpu.matmul %59, %0, %cst_52 {dimension_numbers = #tpu.dot_dimension_numbers<[1], [0], [0], [1], [0, 0, 1, 1], [], []>} : vector<4x16xf32>, vector<16x16xf32>, vector<4x16xf32> -> vector<4x16xf32>
    %cst_53 = arith.constant dense<0.000000e+00> : vector<4x16xf32>
    %62 = tpu.matmul %60, %0, %cst_53 {dimension_numbers = #tpu.dot_dimension_numbers<[1], [0], [0], [1], [0, 0, 1, 1], [], []>} : vector<4x16xf32>, vector<16x16xf32>, vector<4x16xf32> -> vector<4x16xf32>
    %63 = vector.extract_strided_slice %61 {offsets = [0, 0], sizes = [4, 8], strides = [1, 1]} : vector<4x16xf32> to vector<4x8xf32>
    %c0_54 = arith.constant 0 : index
    %c32 = arith.constant 32 : index
    %64 = vector.load %arg7[%c0_54, %c32] : memref<16x64xf32, #tpu.memory_space<vmem>>, vector<4x8xf32>
    tpu.vector_store %arg7[%c0_54, %c32], %63 {strides = array<i32>} : memref<16x64xf32, #tpu.memory_space<vmem>>, vector<4x8xf32>,
    %65 = vector.extract_strided_slice %61 {offsets = [0, 8], sizes = [4, 8], strides = [1, 1]} : vector<4x16xf32> to vector<4x8xf32>
    %c4_55 = arith.constant 4 : index
    %c32_56 = arith.constant 32 : index
    %66 = vector.load %arg7[%c4_55, %c32_56] : memref<16x64xf32, #tpu.memory_space<vmem>>, vector<4x8xf32>
    tpu.vector_store %arg7[%c4_55, %c32_56], %65 {strides = array<i32>} : memref<16x64xf32, #tpu.memory_space<vmem>>, vector<4x8xf32>,
    %67 = vector.extract_strided_slice %62 {offsets = [0, 0], sizes = [4, 8], strides = [1, 1]} : vector<4x16xf32> to vector<4x8xf32>
    %c8_57 = arith.constant 8 : index
    %c32_58 = arith.constant 32 : index
    %68 = vector.load %arg7[%c8_57, %c32_58] : memref<16x64xf32, #tpu.memory_space<vmem>>, vector<4x8xf32>
    tpu.vector_store %arg7[%c8_57, %c32_58], %67 {strides = array<i32>} : memref<16x64xf32, #tpu.memory_space<vmem>>, vector<4x8xf32>,
    %69 = vector.extract_strided_slice %62 {offsets = [0, 8], sizes = [4, 8], strides = [1, 1]} : vector<4x16xf32> to vector<4x8xf32>
    %c12_59 = arith.constant 12 : index
    %c32_60 = arith.constant 32 : index
    %70 = vector.load %arg7[%c12_59, %c32_60] : memref<16x64xf32, #tpu.memory_space<vmem>>, vector<4x8xf32>
    tpu.vector_store %arg7[%c12_59, %c32_60], %69 {strides = array<i32>} : memref<16x64xf32, #tpu.memory_space<vmem>>, vector<4x8xf32>,
    %c0_61 = arith.constant 0 : index
    %c0_62 = arith.constant 0 : index
    %c5 = arith.constant 5 : index
    %c0_63 = arith.constant 0 : index
    %71 = vector.load %arg2[%c0_61, %c0_62, %c5, %c0_63] : memref<1x4x8x32xf32, #tpu.memory_space<vmem>>, vector<1x4x1x32xf32>
    %72 = vector.shape_cast %71 : vector<1x4x1x32xf32> to vector<4x32xf32>
    %73 = vector.extract_strided_slice %72 {offsets = [0, 0], sizes = [4, 16], strides = [1, 1]} : vector<4x32xf32> to vector<4x16xf32>
    %74 = vector.extract_strided_slice %72 {offsets = [0, 16], sizes = [4, 16], strides = [1, 1]} : vector<4x32xf32> to vector<4x16xf32>
    %cst_64 = arith.constant dense<0.000000e+00> : vector<4x16xf32>
    %75 = tpu.matmul %73, %0, %cst_64 {dimension_numbers = #tpu.dot_dimension_numbers<[1], [0], [0], [1], [0, 0, 1, 1], [], []>} : vector<4x16xf32>, vector<16x16xf32>, vector<4x16xf32> -> vector<4x16xf32>
    %cst_65 = arith.constant dense<0.000000e+00> : vector<4x16xf32>
    %76 = tpu.matmul %74, %0, %cst_65 {dimension_numbers = #tpu.dot_dimension_numbers<[1], [0], [0], [1], [0, 0, 1, 1], [], []>} : vector<4x16xf32>, vector<16x16xf32>, vector<4x16xf32> -> vector<4x16xf32>
    %77 = vector.extract_strided_slice %75 {offsets = [0, 0], sizes = [4, 8], strides = [1, 1]} : vector<4x16xf32> to vector<4x8xf32>
    %c0_66 = arith.constant 0 : index
    %c40 = arith.constant 40 : index
    %78 = vector.load %arg7[%c0_66, %c40] : memref<16x64xf32, #tpu.memory_space<vmem>>, vector<4x8xf32>
    tpu.vector_store %arg7[%c0_66, %c40], %77 {strides = array<i32>} : memref<16x64xf32, #tpu.memory_space<vmem>>, vector<4x8xf32>,
    %79 = vector.extract_strided_slice %75 {offsets = [0, 8], sizes = [4, 8], strides = [1, 1]} : vector<4x16xf32> to vector<4x8xf32>
    %c4_67 = arith.constant 4 : index
    %c40_68 = arith.constant 40 : index
    %80 = vector.load %arg7[%c4_67, %c40_68] : memref<16x64xf32, #tpu.memory_space<vmem>>, vector<4x8xf32>
    tpu.vector_store %arg7[%c4_67, %c40_68], %79 {strides = array<i32>} : memref<16x64xf32, #tpu.memory_space<vmem>>, vector<4x8xf32>,
    %81 = vector.extract_strided_slice %76 {offsets = [0, 0], sizes = [4, 8], strides = [1, 1]} : vector<4x16xf32> to vector<4x8xf32>
    %c8_69 = arith.constant 8 : index
    %c40_70 = arith.constant 40 : index
    %82 = vector.load %arg7[%c8_69, %c40_70] : memref<16x64xf32, #tpu.memory_space<vmem>>, vector<4x8xf32>
    tpu.vector_store %arg7[%c8_69, %c40_70], %81 {strides = array<i32>} : memref<16x64xf32, #tpu.memory_space<vmem>>, vector<4x8xf32>,
    %83 = vector.extract_strided_slice %76 {offsets = [0, 8], sizes = [4, 8], strides = [1, 1]} : vector<4x16xf32> to vector<4x8xf32>
    %c12_71 = arith.constant 12 : index
    %c40_72 = arith.constant 40 : index
    %84 = vector.load %arg7[%c12_71, %c40_72] : memref<16x64xf32, #tpu.memory_space<vmem>>, vector<4x8xf32>
    tpu.vector_store %arg7[%c12_71, %c40_72], %83 {strides = array<i32>} : memref<16x64xf32, #tpu.memory_space<vmem>>, vector<4x8xf32>,
    %c0_73 = arith.constant 0 : index
    %c0_74 = arith.constant 0 : index
    %c6 = arith.constant 6 : index
    %c0_75 = arith.constant 0 : index
    %85 = vector.load %arg2[%c0_73, %c0_74, %c6, %c0_75] : memref<1x4x8x32xf32, #tpu.memory_space<vmem>>, vector<1x4x1x32xf32>
    %86 = vector.shape_cast %85 : vector<1x4x1x32xf32> to vector<4x32xf32>
    %87 = vector.extract_strided_slice %86 {offsets = [0, 0], sizes = [4, 16], strides = [1, 1]} : vector<4x32xf32> to vector<4x16xf32>
    %88 = vector.extract_strided_slice %86 {offsets = [0, 16], sizes = [4, 16], strides = [1, 1]} : vector<4x32xf32> to vector<4x16xf32>
    %cst_76 = arith.constant dense<0.000000e+00> : vector<4x16xf32>
    %89 = tpu.matmul %87, %0, %cst_76 {dimension_numbers = #tpu.dot_dimension_numbers<[1], [0], [0], [1], [0, 0, 1, 1], [], []>} : vector<4x16xf32>, vector<16x16xf32>, vector<4x16xf32> -> vector<4x16xf32>
    %cst_77 = arith.constant dense<0.000000e+00> : vector<4x16xf32>
    %90 = tpu.matmul %88, %0, %cst_77 {dimension_numbers = #tpu.dot_dimension_numbers<[1], [0], [0], [1], [0, 0, 1, 1], [], []>} : vector<4x16xf32>, vector<16x16xf32>, vector<4x16xf32> -> vector<4x16xf32>
    %91 = vector.extract_strided_slice %89 {offsets = [0, 0], sizes = [4, 8], strides = [1, 1]} : vector<4x16xf32> to vector<4x8xf32>
    %c0_78 = arith.constant 0 : index
    %c48 = arith.constant 48 : index
    %92 = vector.load %arg7[%c0_78, %c48] : memref<16x64xf32, #tpu.memory_space<vmem>>, vector<4x8xf32>
    tpu.vector_store %arg7[%c0_78, %c48], %91 {strides = array<i32>} : memref<16x64xf32, #tpu.memory_space<vmem>>, vector<4x8xf32>,
    %93 = vector.extract_strided_slice %89 {offsets = [0, 8], sizes = [4, 8], strides = [1, 1]} : vector<4x16xf32> to vector<4x8xf32>
    %c4_79 = arith.constant 4 : index
    %c48_80 = arith.constant 48 : index
    %94 = vector.load %arg7[%c4_79, %c48_80] : memref<16x64xf32, #tpu.memory_space<vmem>>, vector<4x8xf32>
    tpu.vector_store %arg7[%c4_79, %c48_80], %93 {strides = array<i32>} : memref<16x64xf32, #tpu.memory_space<vmem>>, vector<4x8xf32>,
    %95 = vector.extract_strided_slice %90 {offsets = [0, 0], sizes = [4, 8], strides = [1, 1]} : vector<4x16xf32> to vector<4x8xf32>
    %c8_81 = arith.constant 8 : index
    %c48_82 = arith.constant 48 : index
    %96 = vector.load %arg7[%c8_81, %c48_82] : memref<16x64xf32, #tpu.memory_space<vmem>>, vector<4x8xf32>
    tpu.vector_store %arg7[%c8_81, %c48_82], %95 {strides = array<i32>} : memref<16x64xf32, #tpu.memory_space<vmem>>, vector<4x8xf32>,
    %97 = vector.extract_strided_slice %90 {offsets = [0, 8], sizes = [4, 8], strides = [1, 1]} : vector<4x16xf32> to vector<4x8xf32>
    %c12_83 = arith.constant 12 : index
    %c48_84 = arith.constant 48 : index
    %98 = vector.load %arg7[%c12_83, %c48_84] : memref<16x64xf32, #tpu.memory_space<vmem>>, vector<4x8xf32>
    tpu.vector_store %arg7[%c12_83, %c48_84], %97 {strides = array<i32>} : memref<16x64xf32, #tpu.memory_space<vmem>>, vector<4x8xf32>,
    %c0_85 = arith.constant 0 : index
    %c0_86 = arith.constant 0 : index
    %c7 = arith.constant 7 : index
    %c0_87 = arith.constant 0 : index
    %99 = vector.load %arg2[%c0_85, %c0_86, %c7, %c0_87] : memref<1x4x8x32xf32, #tpu.memory_space<vmem>>, vector<1x4x1x32xf32>
    %100 = vector.shape_cast %99 : vector<1x4x1x32xf32> to vector<4x32xf32>
    %101 = vector.extract_strided_slice %100 {offsets = [0, 0], sizes = [4, 16], strides = [1, 1]} : vector<4x32xf32> to vector<4x16xf32>
    %102 = vector.extract_strided_slice %100 {offsets = [0, 16], sizes = [4, 16], strides = [1, 1]} : vector<4x32xf32> to vector<4x16xf32>
    %cst_88 = arith.constant dense<0.000000e+00> : vector<4x16xf32>
    %103 = tpu.matmul %101, %0, %cst_88 {dimension_numbers = #tpu.dot_dimension_numbers<[1], [0], [0], [1], [0, 0, 1, 1], [], []>} : vector<4x16xf32>, vector<16x16xf32>, vector<4x16xf32> -> vector<4x16xf32>
    %cst_89 = arith.constant dense<0.000000e+00> : vector<4x16xf32>
    %104 = tpu.matmul %102, %0, %cst_89 {dimension_numbers = #tpu.dot_dimension_numbers<[1], [0], [0], [1], [0, 0, 1, 1], [], []>} : vector<4x16xf32>, vector<16x16xf32>, vector<4x16xf32> -> vector<4x16xf32>
    %105 = vector.extract_strided_slice %103 {offsets = [0, 0], sizes = [4, 8], strides = [1, 1]} : vector<4x16xf32> to vector<4x8xf32>
    %c0_90 = arith.constant 0 : index
    %c56 = arith.constant 56 : index
    %106 = vector.load %arg7[%c0_90, %c56] : memref<16x64xf32, #tpu.memory_space<vmem>>, vector<4x8xf32>
    tpu.vector_store %arg7[%c0_90, %c56], %105 {strides = array<i32>} : memref<16x64xf32, #tpu.memory_space<vmem>>, vector<4x8xf32>,
    %107 = vector.extract_strided_slice %103 {offsets = [0, 8], sizes = [4, 8], strides = [1, 1]} : vector<4x16xf32> to vector<4x8xf32>
    %c4_91 = arith.constant 4 : index
    %c56_92 = arith.constant 56 : index
    %108 = vector.load %arg7[%c4_91, %c56_92] : memref<16x64xf32, #tpu.memory_space<vmem>>, vector<4x8xf32>
    tpu.vector_store %arg7[%c4_91, %c56_92], %107 {strides = array<i32>} : memref<16x64xf32, #tpu.memory_space<vmem>>, vector<4x8xf32>,
    %109 = vector.extract_strided_slice %104 {offsets = [0, 0], sizes = [4, 8], strides = [1, 1]} : vector<4x16xf32> to vector<4x8xf32>
    %c8_93 = arith.constant 8 : index
    %c56_94 = arith.constant 56 : index
    %110 = vector.load %arg7[%c8_93, %c56_94] : memref<16x64xf32, #tpu.memory_space<vmem>>, vector<4x8xf32>
    tpu.vector_store %arg7[%c8_93, %c56_94], %109 {strides = array<i32>} : memref<16x64xf32, #tpu.memory_space<vmem>>, vector<4x8xf32>,
    %111 = vector.extract_strided_slice %104 {offsets = [0, 8], sizes = [4, 8], strides = [1, 1]} : vector<4x16xf32> to vector<4x8xf32>
    %c12_95 = arith.constant 12 : index
    %c56_96 = arith.constant 56 : index
    %112 = vector.load %arg7[%c12_95, %c56_96] : memref<16x64xf32, #tpu.memory_space<vmem>>, vector<4x8xf32>
    tpu.vector_store %arg7[%c12_95, %c56_96], %111 {strides = array<i32>} : memref<16x64xf32, #tpu.memory_space<vmem>>, vector<4x8xf32>,
    %c0_97 = arith.constant 0 : index
    %c0_98 = arith.constant 0 : index
    %113 = vector.load %arg3[%c0_97, %c0_98] : memref<8x16xf32, #tpu.memory_space<vmem>>, vector<8x16xf32>
    %c0_99 = arith.constant 0 : index
    %c0_100 = arith.constant 0 : index
    %114 = vector.load %arg7[%c0_99, %c0_100] : memref<16x64xf32, #tpu.memory_space<vmem>>, vector<16x64xf32>
    %cst_101 = arith.constant dense<0.000000e+00> : vector<8x64xf32>
    %115 = tpu.matmul %113, %114, %cst_101 {dimension_numbers = #tpu.dot_dimension_numbers<[1], [0], [0], [1], [0, 0, 1, 1], [], []>} : vector<8x16xf32>, vector<16x64xf32>, vector<8x64xf32> -> vector<8x64xf32>
    %c0_102 = arith.constant 0 : index
    %c0_103 = arith.constant 0 : index
    %116 = vector.load %arg4[%c0_102, %c0_103] : memref<8x1xf32, #tpu.memory_space<vmem>>, vector<8x1xf32>
    %117 = vector.broadcast %116 : vector<8x1xf32> to vector<8x64xf32>
    %118 = arith.addf %115, %117 : vector<8x64xf32>
    %c0_104 = arith.constant 0 : index
    %c0_105 = arith.constant 0 : index
    %c0_106 = arith.constant 0 : index
    %119 = vector.load %arg6[%c0_104, %c0_105, %c0_106] : memref<1x8x64xf32, #tpu.memory_space<vmem>>, vector<1x8x64xf32>
    %120 = vector.shape_cast %119 : vector<1x8x64xf32> to vector<8x64xf32>
    %121 = vector.shape_cast %118 : vector<8x64xf32> to vector<1x8x64xf32>
    tpu.vector_store %arg6[%c0_104, %c0_105, %c0_106], %121 {strides = array<i32>} : memref<1x8x64xf32, #tpu.memory_space<vmem>>, vector<1x8x64xf32>,
    return
  }
  func.func @transform_0(%arg0: i32, %arg1: i32) -> (i32, i32, i32, i32) {
    %c0_i32 = arith.constant 0 : i32
    %c0_i32_0 = arith.constant 0 : i32
    %c0_i32_1 = arith.constant 0 : i32
    return %arg0, %c0_i32, %arg1, %c0_i32_0 : i32, i32, i32, i32
  }
  func.func @transform_1(%arg0: i32, %arg1: i32) -> (i32, i32) {
    %c0_i32 = arith.constant 0 : i32
    %c0_i32_0 = arith.constant 0 : i32
    %c0_i32_1 = arith.constant 0 : i32
    return %c0_i32, %c0_i32_0 : i32, i32
  }
  func.func @transform_2(%arg0: i32, %arg1: i32) -> (i32, i32) {
    %c0_i32 = arith.constant 0 : i32
    %c0_i32_0 = arith.constant 0 : i32
    %c0_i32_1 = arith.constant 0 : i32
    return %c0_i32, %c0_i32_0 : i32, i32
  }
  func.func @transform_3(%arg0: i32, %arg1: i32) -> (i32, i32) {
    %c0_i32 = arith.constant 0 : i32
    %c0_i32_0 = arith.constant 0 : i32
    %c0_i32_1 = arith.constant 0 : i32
    return %c0_i32, %c0_i32_0 : i32, i32
  }
  func.func @transform_4(%arg0: i32, %arg1: i32) -> (i32, i32, i32) {
    %c0_i32 = arith.constant 0 : i32
    %c0_i32_0 = arith.constant 0 : i32
    return %arg0, %c0_i32, %arg1 : i32, i32, i32
  }
}

</mosaic_0001>

<llo_original>
// kernel: tpu_custom_call.1
$region0: #{tpu_custom_call.1}
  #allocation0 [shape = 'u32[]', space=smem, size = 0x4, offset = 0x4, fixed_abs, tag = 'smem constant byte address 0x4 - core index']
  #allocation1 [shape = 'u32[144,128]{1,0:T(1,128)}', space=vmem, size = 0x12000, scoped, tag = 'internal scratch']
  #allocation2 [shape = 'f32[16,64]{1,0:T(8,128)}', space=vmem, size = 0x2000, scoped, tag = 'scratch operand']
  %s0 = inlined_call_operand.hbm [shape: f32[2,4,8,32], index: 0, kind: input, shape index: {}]
  %s1 = inlined_call_operand.hbm [shape: f32[8,16], index: 1, kind: input, shape index: {}]
  %s2 = inlined_call_operand.vmem [shape: f32[8,1], index: 2, kind: input, shape index: {}]
  %s3 = inlined_call_operand.vmem [shape: f32[16,16], index: 3, kind: input, shape index: {}]
  %s4 = inlined_call_operand.hbm [shape: f32[2,8,64], index: 4, kind: output, shape index: {}]
  %s5 = sld [smem:[#allocation0]]
  $region57: #{tpu_custom_call.1} parent=0
    _
  %s7 = ssub.s32 1, %s5
  %s8 = scalar_select 0, %s7, %s5
  $region1: #{tpu_custom_call.1} parent=0
    #allocation3 [shape = 'u8[32768]{0}', space=vmem, size = 0x8000, scoped, tag = 'input window, operand 0']
    #allocation4 [shape = 's32[2]{0}', space=sflag, size = 0x8, scoped, tag = 'scoped memory for tpu_custom_call.1']
    #allocation5 [shape = 's32[2]{0}', space=sflag, size = 0x8, scoped, tag = 'scoped memory for tpu_custom_call.1']
    #allocation6 [shape = 'u8[4096]{0}', space=vmem, size = 0x1000, scoped, tag = 'input window, operand 1, single buffered']
    #allocation7 [shape = 's32[1]{0}', space=sflag, size = 0x4, scoped, tag = 'scoped memory for tpu_custom_call.1']
    #allocation8 [shape = 'u8[8192]{0}', space=vmem, size = 0x2000, scoped, tag = 'output window, operand 0']
    %9 = vsyncpa [#allocation4], 0
    %s10 = scalar_lea.sflag [#allocation4], 1
    %11 = vsyncpa %s10, 0
    %12 = vsyncpa [#allocation7], 0
    %13 = vsyncpa [#allocation5], 0
    %s14 = scalar_lea.sflag [#allocation5], 1
    %15 = vsyncpa %s14, 0
    loop: start=0, step=1, limit=4
    $region2: #{tpu_custom_call.1} parent=1 // loop_pre_header
      _
    $region3: #{tpu_custom_call.1} parent=1 // loop_header
      %s17 = sphi 0, %s21
      %p18 = scmp.ge.s32.totalorder %s17, 4
      %s24 = sphi 0, %s36
      %s25 = sphi 0, %s32
      %s26 = sphi 0, %s24
      %s27 = sphi 0, %s25
      %s28 = sphi 0, %s26
      %s29 = sphi 0, %s27
      %s41 = sphi 0, %s43
      %s44 = sphi 0, %s41
      %s45 = sphi 0, %s44
      %s61 = sphi 0, %s45
      %s65 = sphi 0, %s65
      %s67 = sphi 0, %s65
      %s68 = sphi 0, %s67
      %s82 = sphi 0, %s68
      %s86 = sphi 0, %s86
      %s88 = sphi 0, %s86
      %s89 = sphi 0, %s88
      %s103 = sphi 0, %s89
      %s107 = sphi 0, %s107
      %s109 = sphi 0, %s107
      %s110 = sphi 0, %s109
      %s124 = sphi 0, %s110
      %s132 = sphi 0, %s134
      %s135 = sphi 0, %s132
      %s136 = sphi 0, %s135
      %s152 = sphi 0, %s136
    $region4: #{tpu_custom_call.1} parent=1 // loop_header_branch
      %20 = sbr.rel (%p18) target = $region8
    $region5: #{tpu_custom_call.1} parent=1 // loop_body
      %s22 = ssub.s32 %s17, 1
      %s23 = ssub.s32 %s17, 2
      %s30 = sadd.s32 1, %s25
      %p31 = scmp.ge.s32.totalorder %s30, 1
      %s32 = scalar_select %p31, 0, %s30
      %s33 = sadd.s32 1, %s24
      %s34 = scalar_select %p31, %s33, %s24
      %p35 = scmp.ge.s32.totalorder %s34, 2
      %s36 = scalar_select %p35, 0, %s34
      %s37 = ssub.s32 %s24, %s36
      %s38 = ssub.s32 %s25, %s32
      %s39 = sor.u32 %s37, %s38
      %p40 = scmp.eq.s32.totalorder %s39, 0
      %s42 = sadd.s32 %s41, 1
      %s43 = scalar_select %p40, %s41, %s42
      %p46 = pneg %p40
      %p47 = scmp.eq.s32.totalorder %s17, 1
      %p48 = por %p46, %p47
      %p49 = scmp.ne.s32.totalorder %s41, %s44
      %p50 = scmp.eq.s32.totalorder %s17, 0
      %p51 = por %p49, %p50
      %p52 = scmp.ne.s32.totalorder %s41, %s44
      %p53 = scmp.eq.s32.totalorder %s22, 1
      %p54 = por %p52, %p53
      %p55 = scmp.ne.s32.totalorder %s44, %s45
      %p56 = scmp.eq.s32.totalorder %s22, 0
      %p57 = por %p55, %p56
      %p58 = scmp.ne.s32.totalorder %s44, %s45
      %p59 = scmp.eq.s32.totalorder %s23, 1
      %p60 = por %p58, %p59
      %p62 = scmp.ne.s32.totalorder %s45, %s61
      %p63 = scmp.eq.s32.totalorder %s23, 0
      %p64 = por %p62, %p63
      %s66 = sadd.s32 %s65, 1
      %p69 = scmp.eq.s32.totalorder %s17, 1
      %p70 = scmp.ne.s32.totalorder %s65, %s67
      %p71 = scmp.eq.s32.totalorder %s17, 0
      %p72 = por %p70, %p71
      %p73 = scmp.ne.s32.totalorder %s65, %s67
      %p74 = scmp.eq.s32.totalorder %s22, 1
      %p75 = por %p73, %p74
      %p76 = scmp.ne.s32.totalorder %s67, %s68
      %p77 = scmp.eq.s32.totalorder %s22, 0
      %p78 = por %p76, %p77
      %p79 = scmp.ne.s32.totalorder %s67, %s68
      %p80 = scmp.eq.s32.totalorder %s23, 1
      %p81 = por %p79, %p80
      %p83 = scmp.ne.s32.totalorder %s68, %s82
      %p84 = scmp.eq.s32.totalorder %s23, 0
      %p85 = por %p83, %p84
      %s87 = sadd.s32 %s86, 1
      %p90 = scmp.eq.s32.totalorder %s17, 1
      %p91 = scmp.ne.s32.totalorder %s86, %s88
      %p92 = scmp.eq.s32.totalorder %s17, 0
      %p93 = por %p91, %p92
      %p94 = scmp.ne.s32.totalorder %s86, %s88
      %p95 = scmp.eq.s32.totalorder %s22, 1
      %p96 = por %p94, %p95
      %p97 = scmp.ne.s32.totalorder %s88, %s89
      %p98 = scmp.eq.s32.totalorder %s22, 0
      %p99 = por %p97, %p98
      %p100 = scmp.ne.s32.totalorder %s88, %s89
      %p101 = scmp.eq.s32.totalorder %s23, 1
      %p102 = por %p100, %p101
      %p104 = scmp.ne.s32.totalorder %s89, %s103
      %p105 = scmp.eq.s32.totalorder %s23, 0
      %p106 = por %p104, %p105
      %s108 = sadd.s32 %s107, 1
      %p111 = scmp.eq.s32.totalorder %s17, 1
      %p112 = scmp.ne.s32.totalorder %s107, %s109
      %p113 = scmp.eq.s32.totalorder %s17, 0
      %p114 = por %p112, %p113
      %p115 = scmp.ne.s32.totalorder %s107, %s109
      %p116 = scmp.eq.s32.totalorder %s22, 1
      %p117 = por %p115, %p116
      %p118 = scmp.ne.s32.totalorder %s109, %s110
      %p119 = scmp.eq.s32.totalorder %s22, 0
      %p120 = por %p118, %p119
      %p121 = scmp.ne.s32.totalorder %s109, %s110
      %p122 = scmp.eq.s32.totalorder %s23, 1
      %p123 = por %p121, %p122
      %p125 = scmp.ne.s32.totalorder %s110, %s124
      %p126 = scmp.eq.s32.totalorder %s23, 0
      %p127 = por %p125, %p126
      %s128 = ssub.s32 %s24, %s36
      %s129 = ssub.s32 %s25, %s32
      %s130 = sor.u32 %s128, %s129
      %p131 = scmp.eq.s32.totalorder %s130, 0
      %s133 = sadd.s32 %s132, 1
      %s134 = scalar_select %p131, %s132, %s133
      %p137 = pneg %p131
      %p138 = scmp.eq.s32.totalorder %s17, 1
      %p139 = por %p137, %p138
      %p140 = scmp.ne.s32.totalorder %s132, %s135
      %p141 = scmp.eq.s32.totalorder %s17, 0
      %p142 = por %p140, %p141
      %p143 = scmp.ne.s32.totalorder %s132, %s135
      %p144 = scmp.eq.s32.totalorder %s22, 1
      %p145 = por %p143, %p144
      %p146 = scmp.ne.s32.totalorder %s135, %s136
      %p147 = scmp.eq.s32.totalorder %s22, 0
      %p148 = por %p146, %p147
      %p149 = scmp.ne.s32.totalorder %s135, %s136
      %p150 = scmp.eq.s32.totalorder %s23, 1
      %p151 = por %p149, %p150
      %p153 = scmp.ne.s32.totalorder %s136, %s152
      %p154 = scmp.eq.s32.totalorder %s23, 0
      %p155 = por %p153, %p154
      %p156 = scmp.le.s32.totalorder 1, %s17
      %p157 = scmp.lt.s32.totalorder %s17, 3
      %p158 = pnand %p156, %p157
      %p159 = pneg %p158
      // Predicated region
      $region9: #{tpu_custom_call.1} parent=5 // pred_check
        _
      $region10: #{tpu_custom_call.1} parent=5 // pred_check_branch
        %161 = sbr.rel (%p158) target = $region12
      $region11: #{tpu_custom_call.1} parent=5 // pred_region
        %s162 = ssub.s32 %s17, 1
        // Predicated region
        $region13: #{tpu_custom_call.1} parent=11 // pred_check
          %p163 = pneg %p78
        $region14: #{tpu_custom_call.1} parent=11 // pred_check_branch
          %165 = sbr.rel (%p163) target = $region16
        $region15: #{tpu_custom_call.1} parent=11 // pred_region
          %s167 = ssub.s32 128, 128
          %168 = vsyncadd [#allocation7], %s167
          %s170 = sshll.u32 [#allocation6], 4
          %s171 = int_to_ptr.vmem [resolvable:$true] %s170
          %173 = dma.hbm_to_vmem [thread:$0]  %s1, 128, %s171, [#allocation7]
        $region16: #{tpu_custom_call.1} parent=11 // pred_fallthru
          _
        // Predicated region
        $region17: #{tpu_custom_call.1} parent=11 // pred_check
          %p174 = pneg %p99
        $region18: #{tpu_custom_call.1} parent=11 // pred_check_branch
          %176 = sbr.rel (%p174) target = $region20
        $region19: #{tpu_custom_call.1} parent=11 // pred_region
          _
        $region20: #{tpu_custom_call.1} parent=11 // pred_fallthru
          _
        // Predicated region
        $region21: #{tpu_custom_call.1} parent=11 // pred_check
          %p177 = pneg %p120
        $region22: #{tpu_custom_call.1} parent=11 // pred_check_branch
          %179 = sbr.rel (%p177) target = $region24
        $region23: #{tpu_custom_call.1} parent=11 // pred_region
          _
        $region24: #{tpu_custom_call.1} parent=11 // pred_fallthru
          _
      $region12: #{tpu_custom_call.1} parent=5 // pred_fallthru
        _
      %p180 = scmp.lt.s32.totalorder %s17, 2
      // Predicated region
      $region25: #{tpu_custom_call.1} parent=5 // pred_check
        %p181 = pneg %p180
      $region26: #{tpu_custom_call.1} parent=5 // pred_check_branch
        %183 = sbr.rel (%p181) target = $region28
      $region27: #{tpu_custom_call.1} parent=5 // pred_region
        // Predicated region
        $region29: #{tpu_custom_call.1} parent=27 // pred_check
          %p184 = pneg %p51
        $region30: #{tpu_custom_call.1} parent=27 // pred_check_branch
          %186 = sbr.rel (%p184) target = $region32
        $region31: #{tpu_custom_call.1} parent=27 // pred_region
          %s187 = sand.u32 %s41, 1
          %s188 = scalar_lea.sflag [#allocation4], %s187
          %s189 = sand.u32 %s41, 1
          %s190 = smul.addr %s189, 32
          %s191 = scalar_lea.vmem [#allocation3], %s190
          %s193 = ssub.s32 512, 512
          %194 = vsyncadd %s188, %s193
          %s195 = smul.addr %s24, 4
          %s196 = sadd.s32 %s25, %s195
          %s197 = smul.addr %s196, 128
          %s198 = scalar_lea.hbm %s0, %s197
          %s199 = sshll.u32 %s191, 4
          %s200 = int_to_ptr.vmem [resolvable:$true] %s199
          %205 = dma.hbm_to_vmem [thread:$0]  %s198, 512, %s200, %s188, 128, 128, 8
        $region32: #{tpu_custom_call.1} parent=27 // pred_fallthru
          _
      $region28: #{tpu_custom_call.1} parent=5 // pred_fallthru
        _
      %p206 = scmp.le.s32.totalorder 1, %s17
      %p207 = scmp.lt.s32.totalorder %s17, 3
      %p208 = pnand %p206, %p207
      %p209 = pneg %p208
      // Predicated region
      $region33: #{tpu_custom_call.1} parent=5 // pred_check
        _
      $region34: #{tpu_custom_call.1} parent=5 // pred_check_branch
        %211 = sbr.rel (%p208) target = $region36
      $region35: #{tpu_custom_call.1} parent=5 // pred_region
        %s212 = ssub.s32 %s17, 1
        %s213 = sand.u32 %s44, 1
        %s214 = scalar_lea.sflag [#allocation4], %s213
        %s215 = sand.u32 %s44, 1
        %s216 = smul.addr %s215, 32
        %s217 = scalar_lea.vmem [#allocation3], %s216
        // Predicated region
        $region37: #{tpu_custom_call.1} parent=35 // pred_check
          %p218 = pneg %p57
        $region38: #{tpu_custom_call.1} parent=35 // pred_check_branch
          %220 = sbr.rel (%p218) target = $region40
        $region39: #{tpu_custom_call.1} parent=35 // pred_region
          %221 = dma.done %s214, 512
        $region40: #{tpu_custom_call.1} parent=35 // pred_fallthru
          _
        // Predicated region
        $region41: #{tpu_custom_call.1} parent=35 // pred_check
          %p222 = pneg %p78
        $region42: #{tpu_custom_call.1} parent=35 // pred_check_branch
          %224 = sbr.rel (%p222) target = $region44
        $region43: #{tpu_custom_call.1} parent=35 // pred_region
          %225 = dma.done [#allocation7], 128
        $region44: #{tpu_custom_call.1} parent=35 // pred_fallthru
          _
        %s226 = sand.u32 %s44, 1
        %s227 = scalar_lea.sflag [#allocation4], %s226
        %s228 = sand.u32 %s44, 1
        %s229 = smul.addr %s228, 32
        %s230 = scalar_lea.vmem [#allocation3], %s229
        %p231 = pneg %p57
        %p232 = pneg %p54
        %p233 = pneg %p78
        %p234 = pneg %p75
        %p235 = pneg %p99
        %p236 = pneg %p96
        %p237 = pneg %p120
        %p238 = pneg %p117
        %p239 = pneg %p148
        %p240 = pneg %p145
        %s241 = sand.u32 %s135, 1
        %s242 = scalar_lea.sflag [#allocation5], %s241
        %s243 = sand.u32 %s135, 1
        %s244 = smul.addr %s243, 8
        %s245 = scalar_lea.vmem [#allocation8], %s244
        %v246 = vld [vmem:[%s3] sm:$0xff]
        %v247 = vld [vmem:[%s3 + $0x8] sm:$0xff]
        %v248 = vld [vmem:[%s217] sm:$0x1]
        %v249 = vld [vmem:[%s217 + $0x8] sm:$0x1]
        %v250 = vld [vmem:[%s217 + $0x10] sm:$0x1]
        %v251 = vld [vmem:[%s217 + $0x18] sm:$0x1]
        %v256 = vrot.slane %v249, 7
        %vm257 = vcmask 1041409
        %v258 = vsel %vm257, %v256, %v248
        %v259 = vrot.slane %v250, 6
        %vm260 = vcmask 1042434
        %v261 = vsel %vm260, %v259, %v258
        %v262 = vrot.slane %v251, 5
        %vm263 = vcmask 1043459
        %v264 = vsel %vm263, %v262, %v261
        %vm265 = vcmask 130048
        %v266 = vsel %vm265, %v264, 0
        %268 = vmatprep.subr.mxu0 0.0
        %269 = vmatpush1.msra.mxu0 %v246
        %270 = vmatprep.subr.mxu0 0.0
        %271 = vmatpush1.msra.mxu0 %v247
        %272 = vmatprep.subr.mxu0 0.0
        %273 = vmatpush1.msra.mxu0 0.0
        %274 = vmatprep.subr.mxu0 0.0
        %275 = vmatpush1.msra.mxu0 0.0
        %276 = vmatprep.subr.mxu0 0.0
        %277 = vmatpush1.msra.mxu0 0.0
        %278 = vmatprep.subr.mxu0 0.0
        %279 = vmatpush1.msra.mxu0 0.0
        %280 = vmatprep.subr.mxu0 0.0
        %281 = vmatpush1.msra.mxu0 0.0
        %282 = vmatprep.subr.mxu0 0.0
        %283 = vmatpush1.msra.mxu0 0.0
        %284 = vmatprep.subr.mxu0 0.0
        %285 = vmatpush1.msra.mxu0 0.0
        %286 = vmatprep.subr.mxu0 0.0
        %287 = vmatpush1.msra.mxu0 0.0
        %288 = vmatprep.subr.mxu0 0.0
        %289 = vmatpush1.msra.mxu0 0.0
        %290 = vmatprep.subr.mxu0 0.0
        %291 = vmatpush1.msra.mxu0 0.0
        %292 = vmatprep.subr.mxu0 0.0
        %293 = vmatpush1.msra.mxu0 0.0
        %294 = vmatprep.subr.mxu0 0.0
        %295 = vmatpush1.msra.mxu0 0.0
        %296 = vmatprep.subr.mxu0 0.0
        %297 = vmatpush1.msra.mxu0 0.0
        %298 = vmatprep.subr.mxu0 0.0
        %299 = vmatpush1.msra.mxu0 0.0
        %300 = vmatprep.subr.mxu0 0.0
        %301 = vmatpush1.msra.mxu0 0.0
        %302 = vmatprep.subr.mxu0 0.0
        %303 = vmatpush1.msra.mxu0 0.0
        %304 = vmatprep.subr.mxu0 0.0
        %305 = vmatpush1.msra.mxu0 0.0
        %306 = vmatprep.subr.mxu0 0.0
        %307 = vmatpush1.msra.mxu0 0.0
        %308 = vmatprep.subr.mxu0 0.0
        %309 = vmatpush1.msra.mxu0 0.0
        %310 = vmatprep.subr.mxu0 0.0
        %311 = vmatpush1.msra.mxu0 0.0
        %312 = vmatprep.subr.mxu0 0.0
        %313 = vmatpush1.msra.mxu0 0.0
        %314 = vmatprep.subr.mxu0 0.0
        %315 = vmatpush1.msra.mxu0 0.0
        %316 = vmatprep.subr.mxu0 0.0
        %317 = vmatpush1.msra.mxu0 0.0
        %318 = vmatprep.subr.mxu0 0.0
        %319 = vmatpush1.msra.mxu0 0.0
        %320 = vmatprep.subr.mxu0 0.0
        %321 = vmatpush1.msra.mxu0 0.0
        %322 = vmatprep.subr.mxu0 0.0
        %323 = vmatpush1.msra.mxu0 0.0
        %324 = vmatprep.subr.mxu0 0.0
        %325 = vmatpush1.msra.mxu0 0.0
        %326 = vmatprep.subr.mxu0 0.0
        %327 = vmatpush1.msra.mxu0 0.0
        %328 = vmatprep.subr.mxu0 0.0
        %329 = vmatpush1.msra.mxu0 0.0
        %330 = vmatprep.subr.mxu0 0.0
        %331 = vmatpush1.msra.mxu0 0.0
        %332 = vmatprep.mubr.f32.mxu0 0.0
        %333 = vmatmul.mubr.f32.gmra.mrb[0].mxu0 %v266
        %v334 = vpop.f32.mrb[0].mxu0
        %v335 = vadd.f32 0.0, %v334
        %v336 = vpop.f32.mrb[0].mxu0
        %337 = vdwg.mxu0
        %338 = vrot.lane.b32.xlu0 %v264, 112
        %v339 = vpop.permute.xlu0 %338
        %v340 = vsel %vm265, %v339, 0
        %342 = vmatprep.subr.mxu0 0.0
        %343 = vmatpush1.msra.mxu0 %v246
        %344 = vmatprep.subr.mxu0 0.0
        %345 = vmatpush1.msra.mxu0 %v247
        %346 = vmatprep.subr.mxu0 0.0
        %347 = vmatpush1.msra.mxu0 0.0
        %348 = vmatprep.subr.mxu0 0.0
        %349 = vmatpush1.msra.mxu0 0.0
        %350 = vmatprep.subr.mxu0 0.0
        %351 = vmatpush1.msra.mxu0 0.0
        %352 = vmatprep.subr.mxu0 0.0
        %353 = vmatpush1.msra.mxu0 0.0
        %354 = vmatprep.subr.mxu0 0.0
        %355 = vmatpush1.msra.mxu0 0.0
        %356 = vmatprep.subr.mxu0 0.0
        %357 = vmatpush1.msra.mxu0 0.0
        %358 = vmatprep.subr.mxu0 0.0
        %359 = vmatpush1.msra.mxu0 0.0
        %360 = vmatprep.subr.mxu0 0.0
        %361 = vmatpush1.msra.mxu0 0.0
        %362 = vmatprep.subr.mxu0 0.0
        %363 = vmatpush1.msra.mxu0 0.0
        %364 = vmatprep.subr.mxu0 0.0
        %365 = vmatpush1.msra.mxu0 0.0
        %366 = vmatprep.subr.mxu0 0.0
        %367 = vmatpush1.msra.mxu0 0.0
        %368 = vmatprep.subr.mxu0 0.0
        %369 = vmatpush1.msra.mxu0 0.0
        %370 = vmatprep.subr.mxu0 0.0
        %371 = vmatpush1.msra.mxu0 0.0
        %372 = vmatprep.subr.mxu0 0.0
        %373 = vmatpush1.msra.mxu0 0.0
        %374 = vmatprep.subr.mxu0 0.0
        %375 = vmatpush1.msra.mxu0 0.0
        %376 = vmatprep.subr.mxu0 0.0
        %377 = vmatpush1.msra.mxu0 0.0
        %378 = vmatprep.subr.mxu0 0.0
        %379 = vmatpush1.msra.mxu0 0.0
        %380 = vmatprep.subr.mxu0 0.0
        %381 = vmatpush1.msra.mxu0 0.0
        %382 = vmatprep.subr.mxu0 0.0
        %383 = vmatpush1.msra.mxu0 0.0
        %384 = vmatprep.subr.mxu0 0.0
        %385 = vmatpush1.msra.mxu0 0.0
        %386 = vmatprep.subr.mxu0 0.0
        %387 = vmatpush1.msra.mxu0 0.0
        %388 = vmatprep.subr.mxu0 0.0
        %389 = vmatpush1.msra.mxu0 0.0
        %390 = vmatprep.subr.mxu0 0.0
        %391 = vmatpush1.msra.mxu0 0.0
        %392 = vmatprep.subr.mxu0 0.0
        %393 = vmatpush1.msra.mxu0 0.0
        %394 = vmatprep.subr.mxu0 0.0
        %395 = vmatpush1.msra.mxu0 0.0
        %396 = vmatprep.subr.mxu0 0.0
        %397 = vmatpush1.msra.mxu0 0.0
        %398 = vmatprep.subr.mxu0 0.0
        %399 = vmatpush1.msra.mxu0 0.0
        %400 = vmatprep.subr.mxu0 0.0
        %401 = vmatpush1.msra.mxu0 0.0
        %402 = vmatprep.subr.mxu0 0.0
        %403 = vmatpush1.msra.mxu0 0.0
        %404 = vmatprep.subr.mxu0 0.0
        %405 = vmatpush1.msra.mxu0 0.0
        %406 = vmatprep.mubr.f32.mxu0 0.0
        %407 = vmatmul.mubr.f32.gmra.mrb[0].mxu0 %v340
        %v408 = vpop.f32.mrb[0].mxu0
        %v409 = vadd.f32 0.0, %v408
        %v410 = vpop.f32.mrb[0].mxu0
        %411 = vdwg.mxu0
        %vm412 = vcmask 60416
        %413 = vst.msk [vmem:[#allocation2] sm:$0xf] %vm412, %v335
        %415 = vrot.lane.b32.xlu0 %v335, 120
        %v416 = vpop.permute.xlu0 %415
        %418 = vst.msk [vmem:[#allocation2 + $0x4] sm:$0xf] %vm412, %v416
        %419 = vst.msk [vmem:[#allocation2 + $0x8] sm:$0xf] %vm412, %v409
        %421 = vrot.lane.b32.xlu0 %v409, 120
        %v422 = vpop.permute.xlu0 %421
        %424 = vst.msk [vmem:[#allocation2 + $0xc] sm:$0xf] %vm412, %v422
        %v425 = vld [vmem:[%s217 + $0x1] sm:$0x1]
        %v426 = vld [vmem:[%s217 + $0x9] sm:$0x1]
        %v427 = vld [vmem:[%s217 + $0x11] sm:$0x1]
        %v428 = vld [vmem:[%s217 + $0x19] sm:$0x1]
        %v433 = vrot.slane %v426, 7
        %v434 = vsel %vm257, %v433, %v425
        %v435 = vrot.slane %v427, 6
        %v436 = vsel %vm260, %v435, %v434
        %v437 = vrot.slane %v428, 5
        %v438 = vsel %vm263, %v437, %v436
        %v439 = vsel %vm265, %v438, 0
        %441 = vmatprep.subr.mxu0 0.0
        %442 = vmatpush1.msra.mxu0 %v246
        %443 = vmatprep.subr.mxu0 0.0
        %444 = vmatpush1.msra.mxu0 %v247
        %445 = vmatprep.subr.mxu0 0.0
        %446 = vmatpush1.msra.mxu0 0.0
        %447 = vmatprep.subr.mxu0 0.0
        %448 = vmatpush1.msra.mxu0 0.0
        %449 = vmatprep.subr.mxu0 0.0
        %450 = vmatpush1.msra.mxu0 0.0
        %451 = vmatprep.subr.mxu0 0.0
        %452 = vmatpush1.msra.mxu0 0.0
        %453 = vmatprep.subr.mxu0 0.0
        %454 = vmatpush1.msra.mxu0 0.0
        %455 = vmatprep.subr.mxu0 0.0
        %456 = vmatpush1.msra.mxu0 0.0
        %457 = vmatprep.subr.mxu0 0.0
        %458 = vmatpush1.msra.mxu0 0.0
        %459 = vmatprep.subr.mxu0 0.0
        %460 = vmatpush1.msra.mxu0 0.0
        %461 = vmatprep.subr.mxu0 0.0
        %462 = vmatpush1.msra.mxu0 0.0
        %463 = vmatprep.subr.mxu0 0.0
        %464 = vmatpush1.msra.mxu0 0.0
        %465 = vmatprep.subr.mxu0 0.0
        %466 = vmatpush1.msra.mxu0 0.0
        %467 = vmatprep.subr.mxu0 0.0
        %468 = vmatpush1.msra.mxu0 0.0
        %469 = vmatprep.subr.mxu0 0.0
        %470 = vmatpush1.msra.mxu0 0.0
        %471 = vmatprep.subr.mxu0 0.0
        %472 = vmatpush1.msra.mxu0 0.0
        %473 = vmatprep.subr.mxu0 0.0
        %474 = vmatpush1.msra.mxu0 0.0
        %475 = vmatprep.subr.mxu0 0.0
        %476 = vmatpush1.msra.mxu0 0.0
        %477 = vmatprep.subr.mxu0 0.0
        %478 = vmatpush1.msra.mxu0 0.0
        %479 = vmatprep.subr.mxu0 0.0
        %480 = vmatpush1.msra.mxu0 0.0
        %481 = vmatprep.subr.mxu0 0.0
        %482 = vmatpush1.msra.mxu0 0.0
        %483 = vmatprep.subr.mxu0 0.0
        %484 = vmatpush1.msra.mxu0 0.0
        %485 = vmatprep.subr.mxu0 0.0
        %486 = vmatpush1.msra.mxu0 0.0
        %487 = vmatprep.subr.mxu0 0.0
        %488 = vmatpush1.msra.mxu0 0.0
        %489 = vmatprep.subr.mxu0 0.0
        %490 = vmatpush1.msra.mxu0 0.0
        %491 = vmatprep.subr.mxu0 0.0
        %492 = vmatpush1.msra.mxu0 0.0
        %493 = vmatprep.subr.mxu0 0.0
        %494 = vmatpush1.msra.mxu0 0.0
        %495 = vmatprep.subr.mxu0 0.0
        %496 = vmatpush1.msra.mxu0 0.0
        %497 = vmatprep.subr.mxu0 0.0
        %498 = vmatpush1.msra.mxu0 0.0
        %499 = vmatprep.subr.mxu0 0.0
        %500 = vmatpush1.msra.mxu0 0.0
        %501 = vmatprep.subr.mxu0 0.0
        %502 = vmatpush1.msra.mxu0 0.0
        %503 = vmatprep.subr.mxu0 0.0
        %504 = vmatpush1.msra.mxu0 0.0
        %505 = vmatprep.mubr.f32.mxu0 0.0
        %506 = vmatmul.mubr.f32.gmra.mrb[0].mxu0 %v439
        %v507 = vpop.f32.mrb[0].mxu0
        %v508 = vadd.f32 0.0, %v507
        %v509 = vpop.f32.mrb[0].mxu0
        %510 = vdwg.mxu0
        %511 = vrot.lane.b32.xlu0 %v438, 112
        %v512 = vpop.permute.xlu0 %511
        %v513 = vsel %vm265, %v512, 0
        %515 = vmatprep.subr.mxu0 0.0
        %516 = vmatpush1.msra.mxu0 %v246
        %517 = vmatprep.subr.mxu0 0.0
        %518 = vmatpush1.msra.mxu0 %v247
        %519 = vmatprep.subr.mxu0 0.0
        %520 = vmatpush1.msra.mxu0 0.0
        %521 = vmatprep.subr.mxu0 0.0
        %522 = vmatpush1.msra.mxu0 0.0
        %523 = vmatprep.subr.mxu0 0.0
        %524 = vmatpush1.msra.mxu0 0.0
        %525 = vmatprep.subr.mxu0 0.0
        %526 = vmatpush1.msra.mxu0 0.0
        %527 = vmatprep.subr.mxu0 0.0
        %528 = vmatpush1.msra.mxu0 0.0
        %529 = vmatprep.subr.mxu0 0.0
        %530 = vmatpush1.msra.mxu0 0.0
        %531 = vmatprep.subr.mxu0 0.0
        %532 = vmatpush1.msra.mxu0 0.0
        %533 = vmatprep.subr.mxu0 0.0
        %534 = vmatpush1.msra.mxu0 0.0
        %535 = vmatprep.subr.mxu0 0.0
        %536 = vmatpush1.msra.mxu0 0.0
        %537 = vmatprep.subr.mxu0 0.0
        %538 = vmatpush1.msra.mxu0 0.0
        %539 = vmatprep.subr.mxu0 0.0
        %540 = vmatpush1.msra.mxu0 0.0
        %541 = vmatprep.subr.mxu0 0.0
        %542 = vmatpush1.msra.mxu0 0.0
        %543 = vmatprep.subr.mxu0 0.0
        %544 = vmatpush1.msra.mxu0 0.0
        %545 = vmatprep.subr.mxu0 0.0
        %546 = vmatpush1.msra.mxu0 0.0
        %547 = vmatprep.subr.mxu0 0.0
        %548 = vmatpush1.msra.mxu0 0.0
        %549 = vmatprep.subr.mxu0 0.0
        %550 = vmatpush1.msra.mxu0 0.0
        %551 = vmatprep.subr.mxu0 0.0
        %552 = vmatpush1.msra.mxu0 0.0
        %553 = vmatprep.subr.mxu0 0.0
        %554 = vmatpush1.msra.mxu0 0.0
        %555 = vmatprep.subr.mxu0 0.0
        %556 = vmatpush1.msra.mxu0 0.0
        %557 = vmatprep.subr.mxu0 0.0
        %558 = vmatpush1.msra.mxu0 0.0
        %559 = vmatprep.subr.mxu0 0.0
        %560 = vmatpush1.msra.mxu0 0.0
        %561 = vmatprep.subr.mxu0 0.0
        %562 = vmatpush1.msra.mxu0 0.0
        %563 = vmatprep.subr.mxu0 0.0
        %564 = vmatpush1.msra.mxu0 0.0
        %565 = vmatprep.subr.mxu0 0.0
        %566 = vmatpush1.msra.mxu0 0.0
        %567 = vmatprep.subr.mxu0 0.0
        %568 = vmatpush1.msra.mxu0 0.0
        %569 = vmatprep.subr.mxu0 0.0
        %570 = vmatpush1.msra.mxu0 0.0
        %571 = vmatprep.subr.mxu0 0.0
        %572 = vmatpush1.msra.mxu0 0.0
        %573 = vmatprep.subr.mxu0 0.0
        %574 = vmatpush1.msra.mxu0 0.0
        %575 = vmatprep.subr.mxu0 0.0
        %576 = vmatpush1.msra.mxu0 0.0
        %577 = vmatprep.subr.mxu0 0.0
        %578 = vmatpush1.msra.mxu0 0.0
        %579 = vmatprep.mubr.f32.mxu0 0.0
        %580 = vmatmul.mubr.f32.gmra.mrb[0].mxu0 %v513
        %v581 = vpop.f32.mrb[0].mxu0
        %v582 = vadd.f32 0.0, %v581
        %v583 = vpop.f32.mrb[0].mxu0
        %584 = vdwg.mxu0
        %586 = vrot.lane.b32.xlu0 %v508, 8
        %v587 = vpop.permute.xlu0 %586
        %vm589 = vcmask 126016
        %590 = vst.msk [vmem:[#allocation2] sm:$0xf] %vm589, %v587
        %591 = vst.msk [vmem:[#allocation2 + $0x4] sm:$0xf] %vm589, %v508
        %593 = vrot.lane.b32.xlu0 %v582, 8
        %v594 = vpop.permute.xlu0 %593
        %596 = vst.msk [vmem:[#allocation2 + $0x8] sm:$0xf] %vm589, %v594
        %597 = vst.msk [vmem:[#allocation2 + $0xc] sm:$0xf] %vm589, %v582
        %v598 = vld [vmem:[%s217 + $0x2] sm:$0x1]
        %v599 = vld [vmem:[%s217 + $0xa] sm:$0x1]
        %v600 = vld [vmem:[%s217 + $0x12] sm:$0x1]
        %v601 = vld [vmem:[%s217 + $0x1a] sm:$0x1]
        %v606 = vrot.slane %v599, 7
        %v607 = vsel %vm257, %v606, %v598
        %v608 = vrot.slane %v600, 6
        %v609 = vsel %vm260, %v608, %v607
        %v610 = vrot.slane %v601, 5
        %v611 = vsel %vm263, %v610, %v609
        %v612 = vsel %vm265, %v611, 0
        %614 = vmatprep.subr.mxu0 0.0
        %615 = vmatpush1.msra.mxu0 %v246
        %616 = vmatprep.subr.mxu0 0.0
        %617 = vmatpush1.msra.mxu0 %v247
        %618 = vmatprep.subr.mxu0 0.0
        %619 = vmatpush1.msra.mxu0 0.0
        %620 = vmatprep.subr.mxu0 0.0
        %621 = vmatpush1.msra.mxu0 0.0
        %622 = vmatprep.subr.mxu0 0.0
        %623 = vmatpush1.msra.mxu0 0.0
        %624 = vmatprep.subr.mxu0 0.0
        %625 = vmatpush1.msra.mxu0 0.0
        %626 = vmatprep.subr.mxu0 0.0
        %627 = vmatpush1.msra.mxu0 0.0
        %628 = vmatprep.subr.mxu0 0.0
        %629 = vmatpush1.msra.mxu0 0.0
        %630 = vmatprep.subr.mxu0 0.0
        %631 = vmatpush1.msra.mxu0 0.0
        %632 = vmatprep.subr.mxu0 0.0
        %633 = vmatpush1.msra.mxu0 0.0
        %634 = vmatprep.subr.mxu0 0.0
        %635 = vmatpush1.msra.mxu0 0.0
        %636 = vmatprep.subr.mxu0 0.0
        %637 = vmatpush1.msra.mxu0 0.0
        %638 = vmatprep.subr.mxu0 0.0
        %639 = vmatpush1.msra.mxu0 0.0
        %640 = vmatprep.subr.mxu0 0.0
        %641 = vmatpush1.msra.mxu0 0.0
        %642 = vmatprep.subr.mxu0 0.0
        %643 = vmatpush1.msra.mxu0 0.0
        %644 = vmatprep.subr.mxu0 0.0
        %645 = vmatpush1.msra.mxu0 0.0
        %646 = vmatprep.subr.mxu0 0.0
        %647 = vmatpush1.msra.mxu0 0.0
        %648 = vmatprep.subr.mxu0 0.0
        %649 = vmatpush1.msra.mxu0 0.0
        %650 = vmatprep.subr.mxu0 0.0
        %651 = vmatpush1.msra.mxu0 0.0
        %652 = vmatprep.subr.mxu0 0.0
        %653 = vmatpush1.msra.mxu0 0.0
        %654 = vmatprep.subr.mxu0 0.0
        %655 = vmatpush1.msra.mxu0 0.0
        %656 = vmatprep.subr.mxu0 0.0
        %657 = vmatpush1.msra.mxu0 0.0
        %658 = vmatprep.subr.mxu0 0.0
        %659 = vmatpush1.msra.mxu0 0.0
        %660 = vmatprep.subr.mxu0 0.0
        %661 = vmatpush1.msra.mxu0 0.0
        %662 = vmatprep.subr.mxu0 0.0
        %663 = vmatpush1.msra.mxu0 0.0
        %664 = vmatprep.subr.mxu0 0.0
        %665 = vmatpush1.msra.mxu0 0.0
        %666 = vmatprep.subr.mxu0 0.0
        %667 = vmatpush1.msra.mxu0 0.0
        %668 = vmatprep.subr.mxu0 0.0
        %669 = vmatpush1.msra.mxu0 0.0
        %670 = vmatprep.subr.mxu0 0.0
        %671 = vmatpush1.msra.mxu0 0.0
        %672 = vmatprep.subr.mxu0 0.0
        %673 = vmatpush1.msra.mxu0 0.0
        %674 = vmatprep.subr.mxu0 0.0
        %675 = vmatpush1.msra.mxu0 0.0
        %676 = vmatprep.subr.mxu0 0.0
        %677 = vmatpush1.msra.mxu0 0.0
        %678 = vmatprep.mubr.f32.mxu0 0.0
        %679 = vmatmul.mubr.f32.gmra.mrb[0].mxu0 %v612
        %v680 = vpop.f32.mrb[0].mxu0
        %v681 = vadd.f32 0.0, %v680
        %v682 = vpop.f32.mrb[0].mxu0
        %683 = vdwg.mxu0
        %684 = vrot.lane.b32.xlu0 %v611, 112
        %v685 = vpop.permute.xlu0 %684
        %v686 = vsel %vm265, %v685, 0
        %688 = vmatprep.subr.mxu0 0.0
        %689 = vmatpush1.msra.mxu0 %v246
        %690 = vmatprep.subr.mxu0 0.0
        %691 = vmatpush1.msra.mxu0 %v247
        %692 = vmatprep.subr.mxu0 0.0
        %693 = vmatpush1.msra.mxu0 0.0
        %694 = vmatprep.subr.mxu0 0.0
        %695 = vmatpush1.msra.mxu0 0.0
        %696 = vmatprep.subr.mxu0 0.0
        %697 = vmatpush1.msra.mxu0 0.0
        %698 = vmatprep.subr.mxu0 0.0
        %699 = vmatpush1.msra.mxu0 0.0
        %700 = vmatprep.subr.mxu0 0.0
        %701 = vmatpush1.msra.mxu0 0.0
        %702 = vmatprep.subr.mxu0 0.0
        %703 = vmatpush1.msra.mxu0 0.0
        %704 = vmatprep.subr.mxu0 0.0
        %705 = vmatpush1.msra.mxu0 0.0
        %706 = vmatprep.subr.mxu0 0.0
        %707 = vmatpush1.msra.mxu0 0.0
        %708 = vmatprep.subr.mxu0 0.0
        %709 = vmatpush1.msra.mxu0 0.0
        %710 = vmatprep.subr.mxu0 0.0
        %711 = vmatpush1.msra.mxu0 0.0
        %712 = vmatprep.subr.mxu0 0.0
        %713 = vmatpush1.msra.mxu0 0.0
        %714 = vmatprep.subr.mxu0 0.0
        %715 = vmatpush1.msra.mxu0 0.0
        %716 = vmatprep.subr.mxu0 0.0
        %717 = vmatpush1.msra.mxu0 0.0
        %718 = vmatprep.subr.mxu0 0.0
        %719 = vmatpush1.msra.mxu0 0.0
        %720 = vmatprep.subr.mxu0 0.0
        %721 = vmatpush1.msra.mxu0 0.0
        %722 = vmatprep.subr.mxu0 0.0
        %723 = vmatpush1.msra.mxu0 0.0
        %724 = vmatprep.subr.mxu0 0.0
        %725 = vmatpush1.msra.mxu0 0.0
        %726 = vmatprep.subr.mxu0 0.0
        %727 = vmatpush1.msra.mxu0 0.0
        %728 = vmatprep.subr.mxu0 0.0
        %729 = vmatpush1.msra.mxu0 0.0
        %730 = vmatprep.subr.mxu0 0.0
        %731 = vmatpush1.msra.mxu0 0.0
        %732 = vmatprep.subr.mxu0 0.0
        %733 = vmatpush1.msra.mxu0 0.0
        %734 = vmatprep.subr.mxu0 0.0
        %735 = vmatpush1.msra.mxu0 0.0
        %736 = vmatprep.subr.mxu0 0.0
        %737 = vmatpush1.msra.mxu0 0.0
        %738 = vmatprep.subr.mxu0 0.0
        %739 = vmatpush1.msra.mxu0 0.0
        %740 = vmatprep.subr.mxu0 0.0
        %741 = vmatpush1.msra.mxu0 0.0
        %742 = vmatprep.subr.mxu0 0.0
        %743 = vmatpush1.msra.mxu0 0.0
        %744 = vmatprep.subr.mxu0 0.0
        %745 = vmatpush1.msra.mxu0 0.0
        %746 = vmatprep.subr.mxu0 0.0
        %747 = vmatpush1.msra.mxu0 0.0
        %748 = vmatprep.subr.mxu0 0.0
        %749 = vmatpush1.msra.mxu0 0.0
        %750 = vmatprep.subr.mxu0 0.0
        %751 = vmatpush1.msra.mxu0 0.0
        %752 = vmatprep.mubr.f32.mxu0 0.0
        %753 = vmatmul.mubr.f32.gmra.mrb[0].mxu0 %v686
        %v754 = vpop.f32.mrb[0].mxu0
        %v755 = vadd.f32 0.0, %v754
        %v756 = vpop.f32.mrb[0].mxu0
        %757 = vdwg.mxu0
        %759 = vrot.lane.b32.xlu0 %v681, 16
        %v760 = vpop.permute.xlu0 %759
        %vm762 = vcmask 191616
        %763 = vst.msk [vmem:[#allocation2] sm:$0xf] %vm762, %v760
        %764 = vrot.lane.b32.xlu0 %v681, 8
        %v765 = vpop.permute.xlu0 %764
        %767 = vst.msk [vmem:[#allocation2 + $0x4] sm:$0xf] %vm762, %v765
        %769 = vrot.lane.b32.xlu0 %v755, 16
        %v770 = vpop.permute.xlu0 %769
        %772 = vst.msk [vmem:[#allocation2 + $0x8] sm:$0xf] %vm762, %v770
        %773 = vrot.lane.b32.xlu0 %v755, 8
        %v774 = vpop.permute.xlu0 %773
        %776 = vst.msk [vmem:[#allocation2 + $0xc] sm:$0xf] %vm762, %v774
        %v777 = vld [vmem:[%s217 + $0x3] sm:$0x1]
        %v778 = vld [vmem:[%s217 + $0xb] sm:$0x1]
        %v779 = vld [vmem:[%s217 + $0x13] sm:$0x1]
        %v780 = vld [vmem:[%s217 + $0x1b] sm:$0x1]
        %v785 = vrot.slane %v778, 7
        %v786 = vsel %vm257, %v785, %v777
        %v787 = vrot.slane %v779, 6
        %v788 = vsel %vm260, %v787, %v786
        %v789 = vrot.slane %v780, 5
        %v790 = vsel %vm263, %v789, %v788
        %v791 = vsel %vm265, %v790, 0
        %793 = vmatprep.subr.mxu0 0.0
        %794 = vmatpush1.msra.mxu0 %v246
        %795 = vmatprep.subr.mxu0 0.0
        %796 = vmatpush1.msra.mxu0 %v247
        %797 = vmatprep.subr.mxu0 0.0
        %798 = vmatpush1.msra.mxu0 0.0
        %799 = vmatprep.subr.mxu0 0.0
        %800 = vmatpush1.msra.mxu0 0.0
        %801 = vmatprep.subr.mxu0 0.0
        %802 = vmatpush1.msra.mxu0 0.0
        %803 = vmatprep.subr.mxu0 0.0
        %804 = vmatpush1.msra.mxu0 0.0
        %805 = vmatprep.subr.mxu0 0.0
        %806 = vmatpush1.msra.mxu0 0.0
        %807 = vmatprep.subr.mxu0 0.0
        %808 = vmatpush1.msra.mxu0 0.0
        %809 = vmatprep.subr.mxu0 0.0
        %810 = vmatpush1.msra.mxu0 0.0
        %811 = vmatprep.subr.mxu0 0.0
        %812 = vmatpush1.msra.mxu0 0.0
        %813 = vmatprep.subr.mxu0 0.0
        %814 = vmatpush1.msra.mxu0 0.0
        %815 = vmatprep.subr.mxu0 0.0
        %816 = vmatpush1.msra.mxu0 0.0
        %817 = vmatprep.subr.mxu0 0.0
        %818 = vmatpush1.msra.mxu0 0.0
        %819 = vmatprep.subr.mxu0 0.0
        %820 = vmatpush1.msra.mxu0 0.0
        %821 = vmatprep.subr.mxu0 0.0
        %822 = vmatpush1.msra.mxu0 0.0
        %823 = vmatprep.subr.mxu0 0.0
        %824 = vmatpush1.msra.mxu0 0.0
        %825 = vmatprep.subr.mxu0 0.0
        %826 = vmatpush1.msra.mxu0 0.0
        %827 = vmatprep.subr.mxu0 0.0
        %828 = vmatpush1.msra.mxu0 0.0
        %829 = vmatprep.subr.mxu0 0.0
        %830 = vmatpush1.msra.mxu0 0.0
        %831 = vmatprep.subr.mxu0 0.0
        %832 = vmatpush1.msra.mxu0 0.0
        %833 = vmatprep.subr.mxu0 0.0
        %834 = vmatpush1.msra.mxu0 0.0
        %835 = vmatprep.subr.mxu0 0.0
        %836 = vmatpush1.msra.mxu0 0.0
        %837 = vmatprep.subr.mxu0 0.0
        %838 = vmatpush1.msra.mxu0 0.0
        %839 = vmatprep.subr.mxu0 0.0
        %840 = vmatpush1.msra.mxu0 0.0
        %841 = vmatprep.subr.mxu0 0.0
        %842 = vmatpush1.msra.mxu0 0.0
        %843 = vmatprep.subr.mxu0 0.0
        %844 = vmatpush1.msra.mxu0 0.0
        %845 = vmatprep.subr.mxu0 0.0
        %846 = vmatpush1.msra.mxu0 0.0
        %847 = vmatprep.subr.mxu0 0.0
        %848 = vmatpush1.msra.mxu0 0.0
        %849 = vmatprep.subr.mxu0 0.0
        %850 = vmatpush1.msra.mxu0 0.0
        %851 = vmatprep.subr.mxu0 0.0
        %852 = vmatpush1.msra.mxu0 0.0
        %853 = vmatprep.subr.mxu0 0.0
        %854 = vmatpush1.msra.mxu0 0.0
        %855 = vmatprep.subr.mxu0 0.0
        %856 = vmatpush1.msra.mxu0 0.0
        %857 = vmatprep.mubr.f32.mxu0 0.0
        %858 = vmatmul.mubr.f32.gmra.mrb[0].mxu0 %v791
        %v859 = vpop.f32.mrb[0].mxu0
        %v860 = vadd.f32 0.0, %v859
        %v861 = vpop.f32.mrb[0].mxu0
        %862 = vdwg.mxu0
        %863 = vrot.lane.b32.xlu0 %v790, 112
        %v864 = vpop.permute.xlu0 %863
        %v865 = vsel %vm265, %v864, 0
        %867 = vmatprep.subr.mxu0 0.0
        %868 = vmatpush1.msra.mxu0 %v246
        %869 = vmatprep.subr.mxu0 0.0
        %870 = vmatpush1.msra.mxu0 %v247
        %871 = vmatprep.subr.mxu0 0.0
        %872 = vmatpush1.msra.mxu0 0.0
        %873 = vmatprep.subr.mxu0 0.0
        %874 = vmatpush1.msra.mxu0 0.0
        %875 = vmatprep.subr.mxu0 0.0
        %876 = vmatpush1.msra.mxu0 0.0
        %877 = vmatprep.subr.mxu0 0.0
        %878 = vmatpush1.msra.mxu0 0.0
        %879 = vmatprep.subr.mxu0 0.0
        %880 = vmatpush1.msra.mxu0 0.0
        %881 = vmatprep.subr.mxu0 0.0
        %882 = vmatpush1.msra.mxu0 0.0
        %883 = vmatprep.subr.mxu0 0.0
        %884 = vmatpush1.msra.mxu0 0.0
        %885 = vmatprep.subr.mxu0 0.0
        %886 = vmatpush1.msra.mxu0 0.0
        %887 = vmatprep.subr.mxu0 0.0
        %888 = vmatpush1.msra.mxu0 0.0
        %889 = vmatprep.subr.mxu0 0.0
        %890 = vmatpush1.msra.mxu0 0.0
        %891 = vmatprep.subr.mxu0 0.0
        %892 = vmatpush1.msra.mxu0 0.0
        %893 = vmatprep.subr.mxu0 0.0
        %894 = vmatpush1.msra.mxu0 0.0
        %895 = vmatprep.subr.mxu0 0.0
        %896 = vmatpush1.msra.mxu0 0.0
        %897 = vmatprep.subr.mxu0 0.0
        %898 = vmatpush1.msra.mxu0 0.0
        %899 = vmatprep.subr.mxu0 0.0
        %900 = vmatpush1.msra.mxu0 0.0
        %901 = vmatprep.subr.mxu0 0.0
        %902 = vmatpush1.msra.mxu0 0.0
        %903 = vmatprep.subr.mxu0 0.0
        %904 = vmatpush1.msra.mxu0 0.0
        %905 = vmatprep.subr.mxu0 0.0
        %906 = vmatpush1.msra.mxu0 0.0
        %907 = vmatprep.subr.mxu0 0.0
        %908 = vmatpush1.msra.mxu0 0.0
        %909 = vmatprep.subr.mxu0 0.0
        %910 = vmatpush1.msra.mxu0 0.0
        %911 = vmatprep.subr.mxu0 0.0
        %912 = vmatpush1.msra.mxu0 0.0
        %913 = vmatprep.subr.mxu0 0.0
        %914 = vmatpush1.msra.mxu0 0.0
        %915 = vmatprep.subr.mxu0 0.0
        %916 = vmatpush1.msra.mxu0 0.0
        %917 = vmatprep.subr.mxu0 0.0
        %918 = vmatpush1.msra.mxu0 0.0
        %919 = vmatprep.subr.mxu0 0.0
        %920 = vmatpush1.msra.mxu0 0.0
        %921 = vmatprep.subr.mxu0 0.0
        %922 = vmatpush1.msra.mxu0 0.0
        %923 = vmatprep.subr.mxu0 0.0
        %924 = vmatpush1.msra.mxu0 0.0
        %925 = vmatprep.subr.mxu0 0.0
        %926 = vmatpush1.msra.mxu0 0.0
        %927 = vmatprep.subr.mxu0 0.0
        %928 = vmatpush1.msra.mxu0 0.0
        %929 = vmatprep.subr.mxu0 0.0
        %930 = vmatpush1.msra.mxu0 0.0
        %931 = vmatprep.mubr.f32.mxu0 0.0
        %932 = vmatmul.mubr.f32.gmra.mrb[0].mxu0 %v865
        %v933 = vpop.f32.mrb[0].mxu0
        %v934 = vadd.f32 0.0, %v933
        %v935 = vpop.f32.mrb[0].mxu0
        %936 = vdwg.mxu0
        %938 = vrot.lane.b32.xlu0 %v860, 24
        %v939 = vpop.permute.xlu0 %938
        %vm941 = vcmask 257216
        %942 = vst.msk [vmem:[#allocation2] sm:$0xf] %vm941, %v939
        %943 = vrot.lane.b32.xlu0 %v860, 16
        %v944 = vpop.permute.xlu0 %943
        %946 = vst.msk [vmem:[#allocation2 + $0x4] sm:$0xf] %vm941, %v944
        %948 = vrot.lane.b32.xlu0 %v934, 24
        %v949 = vpop.permute.xlu0 %948
        %951 = vst.msk [vmem:[#allocation2 + $0x8] sm:$0xf] %vm941, %v949
        %952 = vrot.lane.b32.xlu0 %v934, 16
        %v953 = vpop.permute.xlu0 %952
        %955 = vst.msk [vmem:[#allocation2 + $0xc] sm:$0xf] %vm941, %v953
        %v956 = vld [vmem:[%s217 + $0x4] sm:$0x1]
        %v957 = vld [vmem:[%s217 + $0xc] sm:$0x1]
        %v958 = vld [vmem:[%s217 + $0x14] sm:$0x1]
        %v959 = vld [vmem:[%s217 + $0x1c] sm:$0x1]
        %v964 = vrot.slane %v957, 7
        %v965 = vsel %vm257, %v964, %v956
        %v966 = vrot.slane %v958, 6
        %v967 = vsel %vm260, %v966, %v965
        %v968 = vrot.slane %v959, 5
        %v969 = vsel %vm263, %v968, %v967
        %v970 = vsel %vm265, %v969, 0
        %972 = vmatprep.subr.mxu0 0.0
        %973 = vmatpush1.msra.mxu0 %v246
        %974 = vmatprep.subr.mxu0 0.0
        %975 = vmatpush1.msra.mxu0 %v247
        %976 = vmatprep.subr.mxu0 0.0
        %977 = vmatpush1.msra.mxu0 0.0
        %978 = vmatprep.subr.mxu0 0.0
        %979 = vmatpush1.msra.mxu0 0.0
        %980 = vmatprep.subr.mxu0 0.0
        %981 = vmatpush1.msra.mxu0 0.0
        %982 = vmatprep.subr.mxu0 0.0
        %983 = vmatpush1.msra.mxu0 0.0
        %984 = vmatprep.subr.mxu0 0.0
        %985 = vmatpush1.msra.mxu0 0.0
        %986 = vmatprep.subr.mxu0 0.0
        %987 = vmatpush1.msra.mxu0 0.0
        %988 = vmatprep.subr.mxu0 0.0
        %989 = vmatpush1.msra.mxu0 0.0
        %990 = vmatprep.subr.mxu0 0.0
        %991 = vmatpush1.msra.mxu0 0.0
        %992 = vmatprep.subr.mxu0 0.0
        %993 = vmatpush1.msra.mxu0 0.0
        %994 = vmatprep.subr.mxu0 0.0
        %995 = vmatpush1.msra.mxu0 0.0
        %996 = vmatprep.subr.mxu0 0.0
        %997 = vmatpush1.msra.mxu0 0.0
        %998 = vmatprep.subr.mxu0 0.0
        %999 = vmatpush1.msra.mxu0 0.0
        %1000 = vmatprep.subr.mxu0 0.0
        %1001 = vmatpush1.msra.mxu0 0.0
        %1002 = vmatprep.subr.mxu0 0.0
        %1003 = vmatpush1.msra.mxu0 0.0
        %1004 = vmatprep.subr.mxu0 0.0
        %1005 = vmatpush1.msra.mxu0 0.0
        %1006 = vmatprep.subr.mxu0 0.0
        %1007 = vmatpush1.msra.mxu0 0.0
        %1008 = vmatprep.subr.mxu0 0.0
        %1009 = vmatpush1.msra.mxu0 0.0
        %1010 = vmatprep.subr.mxu0 0.0
        %1011 = vmatpush1.msra.mxu0 0.0
        %1012 = vmatprep.subr.mxu0 0.0
        %1013 = vmatpush1.msra.mxu0 0.0
        %1014 = vmatprep.subr.mxu0 0.0
        %1015 = vmatpush1.msra.mxu0 0.0
        %1016 = vmatprep.subr.mxu0 0.0
        %1017 = vmatpush1.msra.mxu0 0.0
        %1018 = vmatprep.subr.mxu0 0.0
        %1019 = vmatpush1.msra.mxu0 0.0
        %1020 = vmatprep.subr.mxu0 0.0
        %1021 = vmatpush1.msra.mxu0 0.0
        %1022 = vmatprep.subr.mxu0 0.0
        %1023 = vmatpush1.msra.mxu0 0.0
        %1024 = vmatprep.subr.mxu0 0.0
        %1025 = vmatpush1.msra.mxu0 0.0
        %1026 = vmatprep.subr.mxu0 0.0
        %1027 = vmatpush1.msra.mxu0 0.0
        %1028 = vmatprep.subr.mxu0 0.0
        %1029 = vmatpush1.msra.mxu0 0.0
        %1030 = vmatprep.subr.mxu0 0.0
        %1031 = vmatpush1.msra.mxu0 0.0
        %1032 = vmatprep.subr.mxu0 0.0
        %1033 = vmatpush1.msra.mxu0 0.0
        %1034 = vmatprep.subr.mxu0 0.0
        %1035 = vmatpush1.msra.mxu0 0.0
        %1036 = vmatprep.mubr.f32.mxu0 0.0
        %1037 = vmatmul.mubr.f32.gmra.mrb[0].mxu0 %v970
        %v1038 = vpop.f32.mrb[0].mxu0
        %v1039 = vadd.f32 0.0, %v1038
        %v1040 = vpop.f32.mrb[0].mxu0
        %1041 = vdwg.mxu0
        %1042 = vrot.lane.b32.xlu0 %v969, 112
        %v1043 = vpop.permute.xlu0 %1042
        %v1044 = vsel %vm265, %v1043, 0
        %1046 = vmatprep.subr.mxu0 0.0
        %1047 = vmatpush1.msra.mxu0 %v246
        %1048 = vmatprep.subr.mxu0 0.0
        %1049 = vmatpush1.msra.mxu0 %v247
        %1050 = vmatprep.subr.mxu0 0.0
        %1051 = vmatpush1.msra.mxu0 0.0
        %1052 = vmatprep.subr.mxu0 0.0
        %1053 = vmatpush1.msra.mxu0 0.0
        %1054 = vmatprep.subr.mxu0 0.0
        %1055 = vmatpush1.msra.mxu0 0.0
        %1056 = vmatprep.subr.mxu0 0.0
        %1057 = vmatpush1.msra.mxu0 0.0
        %1058 = vmatprep.subr.mxu0 0.0
        %1059 = vmatpush1.msra.mxu0 0.0
        %1060 = vmatprep.subr.mxu0 0.0
        %1061 = vmatpush1.msra.mxu0 0.0
        %1062 = vmatprep.subr.mxu0 0.0
        %1063 = vmatpush1.msra.mxu0 0.0
        %1064 = vmatprep.subr.mxu0 0.0
        %1065 = vmatpush1.msra.mxu0 0.0
        %1066 = vmatprep.subr.mxu0 0.0
        %1067 = vmatpush1.msra.mxu0 0.0
        %1068 = vmatprep.subr.mxu0 0.0
        %1069 = vmatpush1.msra.mxu0 0.0
        %1070 = vmatprep.subr.mxu0 0.0
        %1071 = vmatpush1.msra.mxu0 0.0
        %1072 = vmatprep.subr.mxu0 0.0
        %1073 = vmatpush1.msra.mxu0 0.0
        %1074 = vmatprep.subr.mxu0 0.0
        %1075 = vmatpush1.msra.mxu0 0.0
        %1076 = vmatprep.subr.mxu0 0.0
        %1077 = vmatpush1.msra.mxu0 0.0
        %1078 = vmatprep.subr.mxu0 0.0
        %1079 = vmatpush1.msra.mxu0 0.0
        %1080 = vmatprep.subr.mxu0 0.0
        %1081 = vmatpush1.msra.mxu0 0.0
        %1082 = vmatprep.subr.mxu0 0.0
        %1083 = vmatpush1.msra.mxu0 0.0
        %1084 = vmatprep.subr.mxu0 0.0
        %1085 = vmatpush1.msra.mxu0 0.0
        %1086 = vmatprep.subr.mxu0 0.0
        %1087 = vmatpush1.msra.mxu0 0.0
        %1088 = vmatprep.subr.mxu0 0.0
        %1089 = vmatpush1.msra.mxu0 0.0
        %1090 = vmatprep.subr.mxu0 0.0
        %1091 = vmatpush1.msra.mxu0 0.0
        %1092 = vmatprep.subr.mxu0 0.0
        %1093 = vmatpush1.msra.mxu0 0.0
        %1094 = vmatprep.subr.mxu0 0.0
        %1095 = vmatpush1.msra.mxu0 0.0
        %1096 = vmatprep.subr.mxu0 0.0
        %1097 = vmatpush1.msra.mxu0 0.0
        %1098 = vmatprep.subr.mxu0 0.0
        %1099 = vmatpush1.msra.mxu0 0.0
        %1100 = vmatprep.subr.mxu0 0.0
        %1101 = vmatpush1.msra.mxu0 0.0
        %1102 = vmatprep.subr.mxu0 0.0
        %1103 = vmatpush1.msra.mxu0 0.0
        %1104 = vmatprep.subr.mxu0 0.0
        %1105 = vmatpush1.msra.mxu0 0.0
        %1106 = vmatprep.subr.mxu0 0.0
        %1107 = vmatpush1.msra.mxu0 0.0
        %1108 = vmatprep.subr.mxu0 0.0
        %1109 = vmatpush1.msra.mxu0 0.0
        %1110 = vmatprep.mubr.f32.mxu0 0.0
        %1111 = vmatmul.mubr.f32.gmra.mrb[0].mxu0 %v1044
        %v1112 = vpop.f32.mrb[0].mxu0
        %v1113 = vadd.f32 0.0, %v1112
        %v1114 = vpop.f32.mrb[0].mxu0
        %1115 = vdwg.mxu0
        %1117 = vrot.lane.b32.xlu0 %v1039, 32
        %v1118 = vpop.permute.xlu0 %1117
        %vm1120 = vcmask 322816
        %1121 = vst.msk [vmem:[#allocation2] sm:$0xf] %vm1120, %v1118
        %1122 = vrot.lane.b32.xlu0 %v1039, 24
        %v1123 = vpop.permute.xlu0 %1122
        %1125 = vst.msk [vmem:[#allocation2 + $0x4] sm:$0xf] %vm1120, %v1123
        %1127 = vrot.lane.b32.xlu0 %v1113, 32
        %v1128 = vpop.permute.xlu0 %1127
        %1130 = vst.msk [vmem:[#allocation2 + $0x8] sm:$0xf] %vm1120, %v1128
        %1131 = vrot.lane.b32.xlu0 %v1113, 24
        %v1132 = vpop.permute.xlu0 %1131
        %1134 = vst.msk [vmem:[#allocation2 + $0xc] sm:$0xf] %vm1120, %v1132
        %v1135 = vld [vmem:[%s217 + $0x5] sm:$0x1]
        %v1136 = vld [vmem:[%s217 + $0xd] sm:$0x1]
        %v1137 = vld [vmem:[%s217 + $0x15] sm:$0x1]
        %v1138 = vld [vmem:[%s217 + $0x1d] sm:$0x1]
        %v1143 = vrot.slane %v1136, 7
        %v1144 = vsel %vm257, %v1143, %v1135
        %v1145 = vrot.slane %v1137, 6
        %v1146 = vsel %vm260, %v1145, %v1144
        %v1147 = vrot.slane %v1138, 5
        %v1148 = vsel %vm263, %v1147, %v1146
        %v1149 = vsel %vm265, %v1148, 0
        %1151 = vmatprep.subr.mxu0 0.0
        %1152 = vmatpush1.msra.mxu0 %v246
        %1153 = vmatprep.subr.mxu0 0.0
        %1154 = vmatpush1.msra.mxu0 %v247
        %1155 = vmatprep.subr.mxu0 0.0
        %1156 = vmatpush1.msra.mxu0 0.0
        %1157 = vmatprep.subr.mxu0 0.0
        %1158 = vmatpush1.msra.mxu0 0.0
        %1159 = vmatprep.subr.mxu0 0.0
        %1160 = vmatpush1.msra.mxu0 0.0
        %1161 = vmatprep.subr.mxu0 0.0
        %1162 = vmatpush1.msra.mxu0 0.0
        %1163 = vmatprep.subr.mxu0 0.0
        %1164 = vmatpush1.msra.mxu0 0.0
        %1165 = vmatprep.subr.mxu0 0.0
        %1166 = vmatpush1.msra.mxu0 0.0
        %1167 = vmatprep.subr.mxu0 0.0
        %1168 = vmatpush1.msra.mxu0 0.0
        %1169 = vmatprep.subr.mxu0 0.0
        %1170 = vmatpush1.msra.mxu0 0.0
        %1171 = vmatprep.subr.mxu0 0.0
        %1172 = vmatpush1.msra.mxu0 0.0
        %1173 = vmatprep.subr.mxu0 0.0
        %1174 = vmatpush1.msra.mxu0 0.0
        %1175 = vmatprep.subr.mxu0 0.0
        %1176 = vmatpush1.msra.mxu0 0.0
        %1177 = vmatprep.subr.mxu0 0.0
        %1178 = vmatpush1.msra.mxu0 0.0
        %1179 = vmatprep.subr.mxu0 0.0
        %1180 = vmatpush1.msra.mxu0 0.0
        %1181 = vmatprep.subr.mxu0 0.0
        %1182 = vmatpush1.msra.mxu0 0.0
        %1183 = vmatprep.subr.mxu0 0.0
        %1184 = vmatpush1.msra.mxu0 0.0
        %1185 = vmatprep.subr.mxu0 0.0
        %1186 = vmatpush1.msra.mxu0 0.0
        %1187 = vmatprep.subr.mxu0 0.0
        %1188 = vmatpush1.msra.mxu0 0.0
        %1189 = vmatprep.subr.mxu0 0.0
        %1190 = vmatpush1.msra.mxu0 0.0
        %1191 = vmatprep.subr.mxu0 0.0
        %1192 = vmatpush1.msra.mxu0 0.0
        %1193 = vmatprep.subr.mxu0 0.0
        %1194 = vmatpush1.msra.mxu0 0.0
        %1195 = vmatprep.subr.mxu0 0.0
        %1196 = vmatpush1.msra.mxu0 0.0
        %1197 = vmatprep.subr.mxu0 0.0
        %1198 = vmatpush1.msra.mxu0 0.0
        %1199 = vmatprep.subr.mxu0 0.0
        %1200 = vmatpush1.msra.mxu0 0.0
        %1201 = vmatprep.subr.mxu0 0.0
        %1202 = vmatpush1.msra.mxu0 0.0
        %1203 = vmatprep.subr.mxu0 0.0
        %1204 = vmatpush1.msra.mxu0 0.0
        %1205 = vmatprep.subr.mxu0 0.0
        %1206 = vmatpush1.msra.mxu0 0.0
        %1207 = vmatprep.subr.mxu0 0.0
        %1208 = vmatpush1.msra.mxu0 0.0
        %1209 = vmatprep.subr.mxu0 0.0
        %1210 = vmatpush1.msra.mxu0 0.0
        %1211 = vmatprep.subr.mxu0 0.0
        %1212 = vmatpush1.msra.mxu0 0.0
        %1213 = vmatprep.subr.mxu0 0.0
        %1214 = vmatpush1.msra.mxu0 0.0
        %1215 = vmatprep.mubr.f32.mxu0 0.0
        %1216 = vmatmul.mubr.f32.gmra.mrb[0].mxu0 %v1149
        %v1217 = vpop.f32.mrb[0].mxu0
        %v1218 = vadd.f32 0.0, %v1217
        %v1219 = vpop.f32.mrb[0].mxu0
        %1220 = vdwg.mxu0
        %1221 = vrot.lane.b32.xlu0 %v1148, 112
        %v1222 = vpop.permute.xlu0 %1221
        %v1223 = vsel %vm265, %v1222, 0
        %1225 = vmatprep.subr.mxu0 0.0
        %1226 = vmatpush1.msra.mxu0 %v246
        %1227 = vmatprep.subr.mxu0 0.0
        %1228 = vmatpush1.msra.mxu0 %v247
        %1229 = vmatprep.subr.mxu0 0.0
        %1230 = vmatpush1.msra.mxu0 0.0
        %1231 = vmatprep.subr.mxu0 0.0
        %1232 = vmatpush1.msra.mxu0 0.0
        %1233 = vmatprep.subr.mxu0 0.0
        %1234 = vmatpush1.msra.mxu0 0.0
        %1235 = vmatprep.subr.mxu0 0.0
        %1236 = vmatpush1.msra.mxu0 0.0
        %1237 = vmatprep.subr.mxu0 0.0
        %1238 = vmatpush1.msra.mxu0 0.0
        %1239 = vmatprep.subr.mxu0 0.0
        %1240 = vmatpush1.msra.mxu0 0.0
        %1241 = vmatprep.subr.mxu0 0.0
        %1242 = vmatpush1.msra.mxu0 0.0
        %1243 = vmatprep.subr.mxu0 0.0
        %1244 = vmatpush1.msra.mxu0 0.0
        %1245 = vmatprep.subr.mxu0 0.0
        %1246 = vmatpush1.msra.mxu0 0.0
        %1247 = vmatprep.subr.mxu0 0.0
        %1248 = vmatpush1.msra.mxu0 0.0
        %1249 = vmatprep.subr.mxu0 0.0
        %1250 = vmatpush1.msra.mxu0 0.0
        %1251 = vmatprep.subr.mxu0 0.0
        %1252 = vmatpush1.msra.mxu0 0.0
        %1253 = vmatprep.subr.mxu0 0.0
        %1254 = vmatpush1.msra.mxu0 0.0
        %1255 = vmatprep.subr.mxu0 0.0
        %1256 = vmatpush1.msra.mxu0 0.0
        %1257 = vmatprep.subr.mxu0 0.0
        %1258 = vmatpush1.msra.mxu0 0.0
        %1259 = vmatprep.subr.mxu0 0.0
        %1260 = vmatpush1.msra.mxu0 0.0
        %1261 = vmatprep.subr.mxu0 0.0
        %1262 = vmatpush1.msra.mxu0 0.0
        %1263 = vmatprep.subr.mxu0 0.0
        %1264 = vmatpush1.msra.mxu0 0.0
        %1265 = vmatprep.subr.mxu0 0.0
        %1266 = vmatpush1.msra.mxu0 0.0
        %1267 = vmatprep.subr.mxu0 0.0
        %1268 = vmatpush1.msra.mxu0 0.0
        %1269 = vmatprep.subr.mxu0 0.0
        %1270 = vmatpush1.msra.mxu0 0.0
        %1271 = vmatprep.subr.mxu0 0.0
        %1272 = vmatpush1.msra.mxu0 0.0
        %1273 = vmatprep.subr.mxu0 0.0
        %1274 = vmatpush1.msra.mxu0 0.0
        %1275 = vmatprep.subr.mxu0 0.0
        %1276 = vmatpush1.msra.mxu0 0.0
        %1277 = vmatprep.subr.mxu0 0.0
        %1278 = vmatpush1.msra.mxu0 0.0
        %1279 = vmatprep.subr.mxu0 0.0
        %1280 = vmatpush1.msra.mxu0 0.0
        %1281 = vmatprep.subr.mxu0 0.0
        %1282 = vmatpush1.msra.mxu0 0.0
        %1283 = vmatprep.subr.mxu0 0.0
        %1284 = vmatpush1.msra.mxu0 0.0
        %1285 = vmatprep.subr.mxu0 0.0
        %1286 = vmatpush1.msra.mxu0 0.0
        %1287 = vmatprep.subr.mxu0 0.0
        %1288 = vmatpush1.msra.mxu0 0.0
        %1289 = vmatprep.mubr.f32.mxu0 0.0
        %1290 = vmatmul.mubr.f32.gmra.mrb[0].mxu0 %v1223
        %v1291 = vpop.f32.mrb[0].mxu0
        %v1292 = vadd.f32 0.0, %v1291
        %v1293 = vpop.f32.mrb[0].mxu0
        %1294 = vdwg.mxu0
        %1296 = vrot.lane.b32.xlu0 %v1218, 40
        %v1297 = vpop.permute.xlu0 %1296
        %vm1299 = vcmask 388416
        %1300 = vst.msk [vmem:[#allocation2] sm:$0xf] %vm1299, %v1297
        %1301 = vrot.lane.b32.xlu0 %v1218, 32
        %v1302 = vpop.permute.xlu0 %1301
        %1304 = vst.msk [vmem:[#allocation2 + $0x4] sm:$0xf] %vm1299, %v1302
        %1306 = vrot.lane.b32.xlu0 %v1292, 40
        %v1307 = vpop.permute.xlu0 %1306
        %1309 = vst.msk [vmem:[#allocation2 + $0x8] sm:$0xf] %vm1299, %v1307
        %1310 = vrot.lane.b32.xlu0 %v1292, 32
        %v1311 = vpop.permute.xlu0 %1310
        %1313 = vst.msk [vmem:[#allocation2 + $0xc] sm:$0xf] %vm1299, %v1311
        %v1314 = vld [vmem:[%s217 + $0x6] sm:$0x1]
        %v1315 = vld [vmem:[%s217 + $0xe] sm:$0x1]
        %v1316 = vld [vmem:[%s217 + $0x16] sm:$0x1]
        %v1317 = vld [vmem:[%s217 + $0x1e] sm:$0x1]
        %v1322 = vrot.slane %v1315, 7
        %v1323 = vsel %vm257, %v1322, %v1314
        %v1324 = vrot.slane %v1316, 6
        %v1325 = vsel %vm260, %v1324, %v1323
        %v1326 = vrot.slane %v1317, 5
        %v1327 = vsel %vm263, %v1326, %v1325
        %v1328 = vsel %vm265, %v1327, 0
        %1330 = vmatprep.subr.mxu0 0.0
        %1331 = vmatpush1.msra.mxu0 %v246
        %1332 = vmatprep.subr.mxu0 0.0
        %1333 = vmatpush1.msra.mxu0 %v247
        %1334 = vmatprep.subr.mxu0 0.0
        %1335 = vmatpush1.msra.mxu0 0.0
        %1336 = vmatprep.subr.mxu0 0.0
        %1337 = vmatpush1.msra.mxu0 0.0
        %1338 = vmatprep.subr.mxu0 0.0
        %1339 = vmatpush1.msra.mxu0 0.0
        %1340 = vmatprep.subr.mxu0 0.0
        %1341 = vmatpush1.msra.mxu0 0.0
        %1342 = vmatprep.subr.mxu0 0.0
        %1343 = vmatpush1.msra.mxu0 0.0
        %1344 = vmatprep.subr.mxu0 0.0
        %1345 = vmatpush1.msra.mxu0 0.0
        %1346 = vmatprep.subr.mxu0 0.0
        %1347 = vmatpush1.msra.mxu0 0.0
        %1348 = vmatprep.subr.mxu0 0.0
        %1349 = vmatpush1.msra.mxu0 0.0
        %1350 = vmatprep.subr.mxu0 0.0
        %1351 = vmatpush1.msra.mxu0 0.0
        %1352 = vmatprep.subr.mxu0 0.0
        %1353 = vmatpush1.msra.mxu0 0.0
        %1354 = vmatprep.subr.mxu0 0.0
        %1355 = vmatpush1.msra.mxu0 0.0
        %1356 = vmatprep.subr.mxu0 0.0
        %1357 = vmatpush1.msra.mxu0 0.0
        %1358 = vmatprep.subr.mxu0 0.0
        %1359 = vmatpush1.msra.mxu0 0.0
        %1360 = vmatprep.subr.mxu0 0.0
        %1361 = vmatpush1.msra.mxu0 0.0
        %1362 = vmatprep.subr.mxu0 0.0
        %1363 = vmatpush1.msra.mxu0 0.0
        %1364 = vmatprep.subr.mxu0 0.0
        %1365 = vmatpush1.msra.mxu0 0.0
        %1366 = vmatprep.subr.mxu0 0.0
        %1367 = vmatpush1.msra.mxu0 0.0
        %1368 = vmatprep.subr.mxu0 0.0
        %1369 = vmatpush1.msra.mxu0 0.0
        %1370 = vmatprep.subr.mxu0 0.0
        %1371 = vmatpush1.msra.mxu0 0.0
        %1372 = vmatprep.subr.mxu0 0.0
        %1373 = vmatpush1.msra.mxu0 0.0
        %1374 = vmatprep.subr.mxu0 0.0
        %1375 = vmatpush1.msra.mxu0 0.0
        %1376 = vmatprep.subr.mxu0 0.0
        %1377 = vmatpush1.msra.mxu0 0.0
        %1378 = vmatprep.subr.mxu0 0.0
        %1379 = vmatpush1.msra.mxu0 0.0
        %1380 = vmatprep.subr.mxu0 0.0
        %1381 = vmatpush1.msra.mxu0 0.0
        %1382 = vmatprep.subr.mxu0 0.0
        %1383 = vmatpush1.msra.mxu0 0.0
        %1384 = vmatprep.subr.mxu0 0.0
        %1385 = vmatpush1.msra.mxu0 0.0
        %1386 = vmatprep.subr.mxu0 0.0
        %1387 = vmatpush1.msra.mxu0 0.0
        %1388 = vmatprep.subr.mxu0 0.0
        %1389 = vmatpush1.msra.mxu0 0.0
        %1390 = vmatprep.subr.mxu0 0.0
        %1391 = vmatpush1.msra.mxu0 0.0
        %1392 = vmatprep.subr.mxu0 0.0
        %1393 = vmatpush1.msra.mxu0 0.0
        %1394 = vmatprep.mubr.f32.mxu0 0.0
        %1395 = vmatmul.mubr.f32.gmra.mrb[0].mxu0 %v1328
        %v1396 = vpop.f32.mrb[0].mxu0
        %v1397 = vadd.f32 0.0, %v1396
        %v1398 = vpop.f32.mrb[0].mxu0
        %1399 = vdwg.mxu0
        %1400 = vrot.lane.b32.xlu0 %v1327, 112
        %v1401 = vpop.permute.xlu0 %1400
        %v1402 = vsel %vm265, %v1401, 0
        %1404 = vmatprep.subr.mxu0 0.0
        %1405 = vmatpush1.msra.mxu0 %v246
        %1406 = vmatprep.subr.mxu0 0.0
        %1407 = vmatpush1.msra.mxu0 %v247
        %1408 = vmatprep.subr.mxu0 0.0
        %1409 = vmatpush1.msra.mxu0 0.0
        %1410 = vmatprep.subr.mxu0 0.0
        %1411 = vmatpush1.msra.mxu0 0.0
        %1412 = vmatprep.subr.mxu0 0.0
        %1413 = vmatpush1.msra.mxu0 0.0
        %1414 = vmatprep.subr.mxu0 0.0
        %1415 = vmatpush1.msra.mxu0 0.0
        %1416 = vmatprep.subr.mxu0 0.0
        %1417 = vmatpush1.msra.mxu0 0.0
        %1418 = vmatprep.subr.mxu0 0.0
        %1419 = vmatpush1.msra.mxu0 0.0
        %1420 = vmatprep.subr.mxu0 0.0
        %1421 = vmatpush1.msra.mxu0 0.0
        %1422 = vmatprep.subr.mxu0 0.0
        %1423 = vmatpush1.msra.mxu0 0.0
        %1424 = vmatprep.subr.mxu0 0.0
        %1425 = vmatpush1.msra.mxu0 0.0
        %1426 = vmatprep.subr.mxu0 0.0
        %1427 = vmatpush1.msra.mxu0 0.0
        %1428 = vmatprep.subr.mxu0 0.0
        %1429 = vmatpush1.msra.mxu0 0.0
        %1430 = vmatprep.subr.mxu0 0.0
        %1431 = vmatpush1.msra.mxu0 0.0
        %1432 = vmatprep.subr.mxu0 0.0
        %1433 = vmatpush1.msra.mxu0 0.0
        %1434 = vmatprep.subr.mxu0 0.0
        %1435 = vmatpush1.msra.mxu0 0.0
        %1436 = vmatprep.subr.mxu0 0.0
        %1437 = vmatpush1.msra.mxu0 0.0
        %1438 = vmatprep.subr.mxu0 0.0
        %1439 = vmatpush1.msra.mxu0 0.0
        %1440 = vmatprep.subr.mxu0 0.0
        %1441 = vmatpush1.msra.mxu0 0.0
        %1442 = vmatprep.subr.mxu0 0.0
        %1443 = vmatpush1.msra.mxu0 0.0
        %1444 = vmatprep.subr.mxu0 0.0
        %1445 = vmatpush1.msra.mxu0 0.0
        %1446 = vmatprep.subr.mxu0 0.0
        %1447 = vmatpush1.msra.mxu0 0.0
        %1448 = vmatprep.subr.mxu0 0.0
        %1449 = vmatpush1.msra.mxu0 0.0
        %1450 = vmatprep.subr.mxu0 0.0
        %1451 = vmatpush1.msra.mxu0 0.0
        %1452 = vmatprep.subr.mxu0 0.0
        %1453 = vmatpush1.msra.mxu0 0.0
        %1454 = vmatprep.subr.mxu0 0.0
        %1455 = vmatpush1.msra.mxu0 0.0
        %1456 = vmatprep.subr.mxu0 0.0
        %1457 = vmatpush1.msra.mxu0 0.0
        %1458 = vmatprep.subr.mxu0 0.0
        %1459 = vmatpush1.msra.mxu0 0.0
        %1460 = vmatprep.subr.mxu0 0.0
        %1461 = vmatpush1.msra.mxu0 0.0
        %1462 = vmatprep.subr.mxu0 0.0
        %1463 = vmatpush1.msra.mxu0 0.0
        %1464 = vmatprep.subr.mxu0 0.0
        %1465 = vmatpush1.msra.mxu0 0.0
        %1466 = vmatprep.subr.mxu0 0.0
        %1467 = vmatpush1.msra.mxu0 0.0
        %1468 = vmatprep.mubr.f32.mxu0 0.0
        %1469 = vmatmul.mubr.f32.gmra.mrb[0].mxu0 %v1402
        %v1470 = vpop.f32.mrb[0].mxu0
        %v1471 = vadd.f32 0.0, %v1470
        %v1472 = vpop.f32.mrb[0].mxu0
        %1473 = vdwg.mxu0
        %1475 = vrot.lane.b32.xlu0 %v1397, 48
        %v1476 = vpop.permute.xlu0 %1475
        %vm1478 = vcmask 454016
        %1479 = vst.msk [vmem:[#allocation2] sm:$0xf] %vm1478, %v1476
        %1480 = vrot.lane.b32.xlu0 %v1397, 40
        %v1481 = vpop.permute.xlu0 %1480
        %1483 = vst.msk [vmem:[#allocation2 + $0x4] sm:$0xf] %vm1478, %v1481
        %1485 = vrot.lane.b32.xlu0 %v1471, 48
        %v1486 = vpop.permute.xlu0 %1485
        %1488 = vst.msk [vmem:[#allocation2 + $0x8] sm:$0xf] %vm1478, %v1486
        %1489 = vrot.lane.b32.xlu0 %v1471, 40
        %v1490 = vpop.permute.xlu0 %1489
        %1492 = vst.msk [vmem:[#allocation2 + $0xc] sm:$0xf] %vm1478, %v1490
        %v1493 = vld [vmem:[%s217 + $0x7] sm:$0x1]
        %v1494 = vld [vmem:[%s217 + $0xf] sm:$0x1]
        %v1495 = vld [vmem:[%s217 + $0x17] sm:$0x1]
        %v1496 = vld [vmem:[%s217 + $0x1f] sm:$0x1]
        %v1501 = vrot.slane %v1494, 7
        %v1502 = vsel %vm257, %v1501, %v1493
        %v1503 = vrot.slane %v1495, 6
        %v1504 = vsel %vm260, %v1503, %v1502
        %v1505 = vrot.slane %v1496, 5
        %v1506 = vsel %vm263, %v1505, %v1504
        %v1507 = vsel %vm265, %v1506, 0
        %1509 = vmatprep.subr.mxu0 0.0
        %1510 = vmatpush1.msra.mxu0 %v246
        %1511 = vmatprep.subr.mxu0 0.0
        %1512 = vmatpush1.msra.mxu0 %v247
        %1513 = vmatprep.subr.mxu0 0.0
        %1514 = vmatpush1.msra.mxu0 0.0
        %1515 = vmatprep.subr.mxu0 0.0
        %1516 = vmatpush1.msra.mxu0 0.0
        %1517 = vmatprep.subr.mxu0 0.0
        %1518 = vmatpush1.msra.mxu0 0.0
        %1519 = vmatprep.subr.mxu0 0.0
        %1520 = vmatpush1.msra.mxu0 0.0
        %1521 = vmatprep.subr.mxu0 0.0
        %1522 = vmatpush1.msra.mxu0 0.0
        %1523 = vmatprep.subr.mxu0 0.0
        %1524 = vmatpush1.msra.mxu0 0.0
        %1525 = vmatprep.subr.mxu0 0.0
        %1526 = vmatpush1.msra.mxu0 0.0
        %1527 = vmatprep.subr.mxu0 0.0
        %1528 = vmatpush1.msra.mxu0 0.0
        %1529 = vmatprep.subr.mxu0 0.0
        %1530 = vmatpush1.msra.mxu0 0.0
        %1531 = vmatprep.subr.mxu0 0.0
        %1532 = vmatpush1.msra.mxu0 0.0
        %1533 = vmatprep.subr.mxu0 0.0
        %1534 = vmatpush1.msra.mxu0 0.0
        %1535 = vmatprep.subr.mxu0 0.0
        %1536 = vmatpush1.msra.mxu0 0.0
        %1537 = vmatprep.subr.mxu0 0.0
        %1538 = vmatpush1.msra.mxu0 0.0
        %1539 = vmatprep.subr.mxu0 0.0
        %1540 = vmatpush1.msra.mxu0 0.0
        %1541 = vmatprep.subr.mxu0 0.0
        %1542 = vmatpush1.msra.mxu0 0.0
        %1543 = vmatprep.subr.mxu0 0.0
        %1544 = vmatpush1.msra.mxu0 0.0
        %1545 = vmatprep.subr.mxu0 0.0
        %1546 = vmatpush1.msra.mxu0 0.0
        %1547 = vmatprep.subr.mxu0 0.0
        %1548 = vmatpush1.msra.mxu0 0.0
        %1549 = vmatprep.subr.mxu0 0.0
        %1550 = vmatpush1.msra.mxu0 0.0
        %1551 = vmatprep.subr.mxu0 0.0
        %1552 = vmatpush1.msra.mxu0 0.0
        %1553 = vmatprep.subr.mxu0 0.0
        %1554 = vmatpush1.msra.mxu0 0.0
        %1555 = vmatprep.subr.mxu0 0.0
        %1556 = vmatpush1.msra.mxu0 0.0
        %1557 = vmatprep.subr.mxu0 0.0
        %1558 = vmatpush1.msra.mxu0 0.0
        %1559 = vmatprep.subr.mxu0 0.0
        %1560 = vmatpush1.msra.mxu0 0.0
        %1561 = vmatprep.subr.mxu0 0.0
        %1562 = vmatpush1.msra.mxu0 0.0
        %1563 = vmatprep.subr.mxu0 0.0
        %1564 = vmatpush1.msra.mxu0 0.0
        %1565 = vmatprep.subr.mxu0 0.0
        %1566 = vmatpush1.msra.mxu0 0.0
        %1567 = vmatprep.subr.mxu0 0.0
        %1568 = vmatpush1.msra.mxu0 0.0
        %1569 = vmatprep.subr.mxu0 0.0
        %1570 = vmatpush1.msra.mxu0 0.0
        %1571 = vmatprep.subr.mxu0 0.0
        %1572 = vmatpush1.msra.mxu0 0.0
        %1573 = vmatprep.mubr.f32.mxu0 0.0
        %1574 = vmatmul.mubr.f32.gmra.mrb[0].mxu0 %v1507
        %v1575 = vpop.f32.mrb[0].mxu0
        %v1576 = vadd.f32 0.0, %v1575
        %v1577 = vpop.f32.mrb[0].mxu0
        %1578 = vdwg.mxu0
        %1579 = vrot.lane.b32.xlu0 %v1506, 112
        %v1580 = vpop.permute.xlu0 %1579
        %v1581 = vsel %vm265, %v1580, 0
        %1583 = vmatprep.subr.mxu0 0.0
        %1584 = vmatpush1.msra.mxu0 %v246
        %1585 = vmatprep.subr.mxu0 0.0
        %1586 = vmatpush1.msra.mxu0 %v247
        %1587 = vmatprep.subr.mxu0 0.0
        %1588 = vmatpush1.msra.mxu0 0.0
        %1589 = vmatprep.subr.mxu0 0.0
        %1590 = vmatpush1.msra.mxu0 0.0
        %1591 = vmatprep.subr.mxu0 0.0
        %1592 = vmatpush1.msra.mxu0 0.0
        %1593 = vmatprep.subr.mxu0 0.0
        %1594 = vmatpush1.msra.mxu0 0.0
        %1595 = vmatprep.subr.mxu0 0.0
        %1596 = vmatpush1.msra.mxu0 0.0
        %1597 = vmatprep.subr.mxu0 0.0
        %1598 = vmatpush1.msra.mxu0 0.0
        %1599 = vmatprep.subr.mxu0 0.0
        %1600 = vmatpush1.msra.mxu0 0.0
        %1601 = vmatprep.subr.mxu0 0.0
        %1602 = vmatpush1.msra.mxu0 0.0
        %1603 = vmatprep.subr.mxu0 0.0
        %1604 = vmatpush1.msra.mxu0 0.0
        %1605 = vmatprep.subr.mxu0 0.0
        %1606 = vmatpush1.msra.mxu0 0.0
        %1607 = vmatprep.subr.mxu0 0.0
        %1608 = vmatpush1.msra.mxu0 0.0
        %1609 = vmatprep.subr.mxu0 0.0
        %1610 = vmatpush1.msra.mxu0 0.0
        %1611 = vmatprep.subr.mxu0 0.0
        %1612 = vmatpush1.msra.mxu0 0.0
        %1613 = vmatprep.subr.mxu0 0.0
        %1614 = vmatpush1.msra.mxu0 0.0
        %1615 = vmatprep.subr.mxu0 0.0
        %1616 = vmatpush1.msra.mxu0 0.0
        %1617 = vmatprep.subr.mxu0 0.0
        %1618 = vmatpush1.msra.mxu0 0.0
        %1619 = vmatprep.subr.mxu0 0.0
        %1620 = vmatpush1.msra.mxu0 0.0
        %1621 = vmatprep.subr.mxu0 0.0
        %1622 = vmatpush1.msra.mxu0 0.0
        %1623 = vmatprep.subr.mxu0 0.0
        %1624 = vmatpush1.msra.mxu0 0.0
        %1625 = vmatprep.subr.mxu0 0.0
        %1626 = vmatpush1.msra.mxu0 0.0
        %1627 = vmatprep.subr.mxu0 0.0
        %1628 = vmatpush1.msra.mxu0 0.0
        %1629 = vmatprep.subr.mxu0 0.0
        %1630 = vmatpush1.msra.mxu0 0.0
        %1631 = vmatprep.subr.mxu0 0.0
        %1632 = vmatpush1.msra.mxu0 0.0
        %1633 = vmatprep.subr.mxu0 0.0
        %1634 = vmatpush1.msra.mxu0 0.0
        %1635 = vmatprep.subr.mxu0 0.0
        %1636 = vmatpush1.msra.mxu0 0.0
        %1637 = vmatprep.subr.mxu0 0.0
        %1638 = vmatpush1.msra.mxu0 0.0
        %1639 = vmatprep.subr.mxu0 0.0
        %1640 = vmatpush1.msra.mxu0 0.0
        %1641 = vmatprep.subr.mxu0 0.0
        %1642 = vmatpush1.msra.mxu0 0.0
        %1643 = vmatprep.subr.mxu0 0.0
        %1644 = vmatpush1.msra.mxu0 0.0
        %1645 = vmatprep.subr.mxu0 0.0
        %1646 = vmatpush1.msra.mxu0 0.0
        %1647 = vmatprep.mubr.f32.mxu0 0.0
        %1648 = vmatmul.mubr.f32.gmra.mrb[0].mxu0 %v1581
        %v1649 = vpop.f32.mrb[0].mxu0
        %v1650 = vadd.f32 0.0, %v1649
        %v1651 = vpop.f32.mrb[0].mxu0
        %1652 = vdwg.mxu0
        %1654 = vrot.lane.b32.xlu0 %v1576, 56
        %v1655 = vpop.permute.xlu0 %1654
        %vm1657 = vcmask 519616
        %1658 = vst.msk [vmem:[#allocation2] sm:$0xf] %vm1657, %v1655
        %1659 = vrot.lane.b32.xlu0 %v1576, 48
        %v1660 = vpop.permute.xlu0 %1659
        %1662 = vst.msk [vmem:[#allocation2 + $0x4] sm:$0xf] %vm1657, %v1660
        %1664 = vrot.lane.b32.xlu0 %v1650, 56
        %v1665 = vpop.permute.xlu0 %1664
        %1667 = vst.msk [vmem:[#allocation2 + $0x8] sm:$0xf] %vm1657, %v1665
        %1668 = vrot.lane.b32.xlu0 %v1650, 48
        %v1669 = vpop.permute.xlu0 %1668
        %1671 = vst.msk [vmem:[#allocation2 + $0xc] sm:$0xf] %vm1657, %v1669
        %v1672 = vld [vmem:[#allocation6] sm:$0xff]
        %v1673 = vld [vmem:[#allocation2] sm:$0xff]
        %v1674 = vld [vmem:[#allocation2 + $0x8] sm:$0xff]
        %v1675 = vld [vmem:[%s2] sm:$0xff]
        %1677 = vset.pattern.permute.xlu0 0
        %1678 = vperm.xlu0 %1677, %v1675
        %v1679 = vpop.permute.xlu0 %1678
        %v1682 = vsel %vm265, %v1672, 0
        %1684 = vmatprep.subr.mxu0 0.0
        %1685 = vmatpush1.msra.mxu0 %v1673
        %1686 = vmatprep.subr.mxu0 0.0
        %1687 = vmatpush1.msra.mxu0 %v1674
        %1688 = vmatprep.subr.mxu0 0.0
        %1689 = vmatpush1.msra.mxu0 0.0
        %1690 = vmatprep.subr.mxu0 0.0
        %1691 = vmatpush1.msra.mxu0 0.0
        %1692 = vmatprep.subr.mxu0 0.0
        %1693 = vmatpush1.msra.mxu0 0.0
        %1694 = vmatprep.subr.mxu0 0.0
        %1695 = vmatpush1.msra.mxu0 0.0
        %1696 = vmatprep.subr.mxu0 0.0
        %1697 = vmatpush1.msra.mxu0 0.0
        %1698 = vmatprep.subr.mxu0 0.0
        %1699 = vmatpush1.msra.mxu0 0.0
        %1700 = vmatprep.subr.mxu0 0.0
        %1701 = vmatpush1.msra.mxu0 0.0
        %1702 = vmatprep.subr.mxu0 0.0
        %1703 = vmatpush1.msra.mxu0 0.0
        %1704 = vmatprep.subr.mxu0 0.0
        %1705 = vmatpush1.msra.mxu0 0.0
        %1706 = vmatprep.subr.mxu0 0.0
        %1707 = vmatpush1.msra.mxu0 0.0
        %1708 = vmatprep.subr.mxu0 0.0
        %1709 = vmatpush1.msra.mxu0 0.0
        %1710 = vmatprep.subr.mxu0 0.0
        %1711 = vmatpush1.msra.mxu0 0.0
        %1712 = vmatprep.subr.mxu0 0.0
        %1713 = vmatpush1.msra.mxu0 0.0
        %1714 = vmatprep.subr.mxu0 0.0
        %1715 = vmatpush1.msra.mxu0 0.0
        %1716 = vmatprep.subr.mxu0 0.0
        %1717 = vmatpush1.msra.mxu0 0.0
        %1718 = vmatprep.subr.mxu0 0.0
        %1719 = vmatpush1.msra.mxu0 0.0
        %1720 = vmatprep.subr.mxu0 0.0
        %1721 = vmatpush1.msra.mxu0 0.0
        %1722 = vmatprep.subr.mxu0 0.0
        %1723 = vmatpush1.msra.mxu0 0.0
        %1724 = vmatprep.subr.mxu0 0.0
        %1725 = vmatpush1.msra.mxu0 0.0
        %1726 = vmatprep.subr.mxu0 0.0
        %1727 = vmatpush1.msra.mxu0 0.0
        %1728 = vmatprep.subr.mxu0 0.0
        %1729 = vmatpush1.msra.mxu0 0.0
        %1730 = vmatprep.subr.mxu0 0.0
        %1731 = vmatpush1.msra.mxu0 0.0
        %1732 = vmatprep.subr.mxu0 0.0
        %1733 = vmatpush1.msra.mxu0 0.0
        %1734 = vmatprep.subr.mxu0 0.0
        %1735 = vmatpush1.msra.mxu0 0.0
        %1736 = vmatprep.subr.mxu0 0.0
        %1737 = vmatpush1.msra.mxu0 0.0
        %1738 = vmatprep.subr.mxu0 0.0
        %1739 = vmatpush1.msra.mxu0 0.0
        %1740 = vmatprep.subr.mxu0 0.0
        %1741 = vmatpush1.msra.mxu0 0.0
        %1742 = vmatprep.subr.mxu0 0.0
        %1743 = vmatpush1.msra.mxu0 0.0
        %1744 = vmatprep.subr.mxu0 0.0
        %1745 = vmatpush1.msra.mxu0 0.0
        %1746 = vmatprep.subr.mxu0 0.0
        %1747 = vmatpush1.msra.mxu0 0.0
        %1748 = vmatprep.mubr.f32.mxu0 0.0
        %1749 = vmatmul.mubr.f32.gmra.mrb[0].mxu0 %v1682
        %v1750 = vpop.f32.mrb[0].mxu0
        %v1751 = vadd.f32 %v1679, %v1750
        %v1752 = vpop.f32.mrb[0].mxu0
        %1753 = vdwg.mxu0
        %vm1754 = vcmask 523264
        %1755 = vst.msk [vmem:[%s245] sm:$0xff] %vm1754, %v1751
        %s1756 = sand.u32 %s135, 1
        %s1757 = scalar_lea.sflag [#allocation5], %s1756
        %s1758 = sand.u32 %s135, 1
        %s1759 = smul.addr %s1758, 8
        %s1760 = scalar_lea.vmem [#allocation8], %s1759
        // Predicated region
        $region45: #{tpu_custom_call.1} parent=35 // pred_check
          %p1761 = pneg %p145
        $region46: #{tpu_custom_call.1} parent=35 // pred_check_branch
          %1763 = sbr.rel (%p1761) target = $region48
        $region47: #{tpu_custom_call.1} parent=35 // pred_region
          %s1765 = ssub.s32 128, 128
          %1766 = vsyncadd %s1757, %s1765
          %s1767 = sadd.s32 %s27, %s26
          %s1768 = smul.addr %s1767, 128
          %s1769 = scalar_lea.hbm %s4, %s1768
          %s1771 = sshll.u32 %s1760, 4
          %s1772 = int_to_ptr.vmem [resolvable:$true] %s1771
          %1774 = dma.vmem_to_hbm [thread:$0]  %s1772, 128, %s1769, %s1757
        $region48: #{tpu_custom_call.1} parent=35 // pred_fallthru
          _
      $region36: #{tpu_custom_call.1} parent=5 // pred_fallthru
        _
      %p1775 = scmp.le.s32.totalorder 2, %s17
      // Predicated region
      $region49: #{tpu_custom_call.1} parent=5 // pred_check
        %p1776 = pneg %p1775
      $region50: #{tpu_custom_call.1} parent=5 // pred_check_branch
        %1778 = sbr.rel (%p1776) target = $region52
      $region51: #{tpu_custom_call.1} parent=5 // pred_region
        %s1779 = ssub.s32 %s17, 2
        // Predicated region
        $region53: #{tpu_custom_call.1} parent=51 // pred_check
          %p1780 = pneg %p151
        $region54: #{tpu_custom_call.1} parent=51 // pred_check_branch
          %1782 = sbr.rel (%p1780) target = $region56
        $region55: #{tpu_custom_call.1} parent=51 // pred_region
          %s1783 = sand.u32 %s136, 1
          %s1784 = scalar_lea.sflag [#allocation5], %s1783
          %s1785 = sand.u32 %s136, 1
          %s1786 = smul.addr %s1785, 8
          %s1787 = scalar_lea.vmem [#allocation8], %s1786
          %1788 = dma.done %s1784, 128
        $region56: #{tpu_custom_call.1} parent=51 // pred_fallthru
          _
      $region52: #{tpu_custom_call.1} parent=5 // pred_fallthru
        _
    $region6: #{tpu_custom_call.1} parent=1 // loop_footer
      %s21 = sadd.s32 1, %s17
    $region7: #{tpu_custom_call.1} parent=1 // loop_footer_branch
      %16 = sbr.rel target = $region3
    $region8: #{tpu_custom_call.1} parent=1 // loop_exit
      _
    %1789 = vsyncpa [#allocation4], 1
    %s1790 = scalar_lea.sflag [#allocation4], 1
    %1791 = vsyncpa %s1790, 1
    %1792 = vsyncpa [#allocation7], 1
    %1793 = vsyncpa [#allocation5], 1
    %s1794 = scalar_lea.sflag [#allocation5], 1
    %1795 = vsyncpa %s1794, 1

</llo_original>
